<compile_context>
chip_gen: v5e
topology: v5e:2x2
jax: 0.10.0
libtpu: 0.0.40
codegen_flags: <defaults>
</compile_context>

<pallas_src>
import functools

import jax
import jax.numpy as jnp
from jax.experimental import pallas as pl
from jax.experimental.pallas import tpu as pltpu


def _seg3_kernel(x_ref, m_ref, w1_ref, b1_ref, w2_ref, b2_ref, w3_ref, b3_ref,
                 o_ref, slab1_ref, slab2_ref, *, H, W):
    # x_ref  : (1, Cin, H*W)   input image, channels in sublanes, pixels in lanes
    # m_ref  : (9, 1, H*W)     SAME-padding border masks (1.0 inside, 0.0 pad)
    # w1_ref : (C1, 9*Cin)     conv1 weights, BN1 scale folded, bf16
    # b1_ref : (C1, 1)         folded BN1 bias (f32)
    # w2_ref : (C2, 9*C1)      conv2 weights, BN2 scale folded, bf16
    # b2_ref : (C2, 1)         folded BN2 bias (f32)
    # w3_ref : (Cout, C2)      1x1 conv weights, bf16
    # b3_ref : (Cout, 1)       1x1 conv bias (f32)
    # o_ref  : (1, Cout, H*W)  lane-dense output
    # slab1_ref / slab2_ref : VMEM im2col scratch (9*Cin, H*W) / (9*C1, H*W)
    HW = H * W

    def im2col3x3(a, slab_ref):
        # a: (C, HW) f32. Writes the 9 spatially shifted, border-masked copies
        # of `a` into slab_ref rows [t*C, (t+1)*C), t = dy*3+dx (SAME padding).
        C = a.shape[0]
        for dy in range(3):
            for dx in range(3):
                t = dy * 3 + dx
                s = (dy - 1) * W + (dx - 1)          # flat spatial shift
                if s == 0:
                    tap = a                           # center tap: no shift/mask
                else:
                    # roll so lane p holds pixel p+s, then zero lanes whose
                    # source (r+dy-1, c+dx-1) falls in the SAME zero padding.
                    tap = pltpu.roll(a, (-s) % HW, axis=1) * m_ref[t]
                slab_ref[pl.ds(t * C, C), :] = tap
        return slab_ref[...]

    # ---- conv1 (3x3, SAME) + folded BN1 + ReLU : one bf16 MXU matmul ----
    x = x_ref[0]                                              # (Cin, HW) f32
    slab1 = im2col3x3(x, slab1_ref).astype(jnp.bfloat16)      # (9*Cin, HW)
    h1 = jnp.dot(w1_ref[...], slab1, preferred_element_type=jnp.float32)
    h1 = jnp.maximum(h1 + b1_ref[...], 0.0)                   # (C1, HW)

    # ---- conv2 (3x3, SAME) + folded BN2 + ReLU ----
    slab2 = im2col3x3(h1, slab2_ref).astype(jnp.bfloat16)     # (9*C1, HW)
    h2 = jnp.dot(w2_ref[...], slab2, preferred_element_type=jnp.float32)
    h2 = jnp.maximum(h2 + b2_ref[...], 0.0)                   # (C2, HW)

    # ---- conv3 (1x1) + bias ----
    out = jnp.dot(w3_ref[...], h2.astype(jnp.bfloat16),
                  preferred_element_type=jnp.float32) + b3_ref[...]
    o_ref[0] = out.astype(o_ref.dtype)                        # (Cout, HW)


@jax.jit
def seg3_forward(x_nchw, w1, s1, b1, w2, s2, b2, w3, b3):
    """Pallas forward. x_nchw: (N, Cin, H, W) float32 -> (N, Cout, H, W)."""
    N, Cin, H, W = x_nchw.shape
    C1, C2, Cout = w1.shape[3], w2.shape[3], w3.shape[1]
    HW = H * W

    # NCHW -> (N, Cin, H*W): pure reshape, no transpose / no padded HBM copy.
    x = x_nchw.reshape(N, Cin, HW)

    # Fold eval-mode BN scale into the conv weights, reorder HWIO ->
    # (Cout, 9*Cin) matching the kernel's im2col row order (tap-major,
    # channel-minor) and cast to bf16 (MXU-native; accumulation stays f32).
    w1m = jnp.transpose(w1 * s1[0], (3, 0, 1, 2)).reshape(C1, 9 * Cin)
    w2m = jnp.transpose(w2 * s2[0], (3, 0, 1, 2)).reshape(C2, 9 * C1)
    w1m = w1m.astype(jnp.bfloat16)
    w2m = w2m.astype(jnp.bfloat16)
    w3m = w3.T.astype(jnp.bfloat16)                  # (Cout, C2)
    b1c = b1[0].reshape(C1, 1)
    b2c = b2[0].reshape(C2, 1)
    b3c = b3[0].reshape(Cout, 1)

    # Border masks for the 9 taps of a SAME 3x3 conv: 1.0 where the shifted
    # source pixel is inside the image, 0.0 where the conv reads zero padding
    # (also kills the circular wrap of the in-kernel lane roll).
    rows = jnp.arange(H).reshape(H, 1)
    cols = jnp.arange(W).reshape(1, W)
    masks = []
    for dy in range(3):
        for dx in range(3):
            sy, sx = dy - 1, dx - 1
            valid = ((rows + sy >= 0) & (rows + sy < H) &
                     (cols + sx >= 0) & (cols + sx < W))
            masks.append(valid.reshape(1, HW))
    masks = jnp.stack(masks, axis=0).astype(jnp.float32)      # (9, 1, HW)

    out = pl.pallas_call(
        functools.partial(_seg3_kernel, H=H, W=W),
        out_shape=jax.ShapeDtypeStruct((N, Cout, HW), jnp.float32),
        grid_spec=pltpu.PrefetchScalarGridSpec(
            num_scalar_prefetch=0,
            grid=(N,),
            in_specs=[
                pl.BlockSpec((1, Cin, HW), lambda n: (n, 0, 0)),
                pl.BlockSpec((9, 1, HW), lambda n: (0, 0, 0)),
                pl.BlockSpec((C1, 9 * Cin), lambda n: (0, 0)),
                pl.BlockSpec((C1, 1), lambda n: (0, 0)),
                pl.BlockSpec((C2, 9 * C1), lambda n: (0, 0)),
                pl.BlockSpec((C2, 1), lambda n: (0, 0)),
                pl.BlockSpec((Cout, C2), lambda n: (0, 0)),
                pl.BlockSpec((Cout, 1), lambda n: (0, 0)),
            ],
            out_specs=pl.BlockSpec((1, Cout, HW), lambda n: (n, 0, 0)),
            scratch_shapes=[
                pltpu.VMEM((9 * Cin, HW), jnp.float32),   # conv1 im2col slab
                pltpu.VMEM((9 * C1, HW), jnp.float32),    # conv2 im2col slab
            ],
        ),
        # Batch elements are independent -> "parallel" lets v7x shard the grid
        # across its 2 TensorCores (harmless no-op on single-TC v5e/v6e).
        compiler_params=pltpu.CompilerParams(
            dimension_semantics=("parallel",)),
    )(x, masks, w1m, b1c, w2m, b2c, w3m, b3c)

    # (N, Cout, H*W) -> NCHW is a free reshape (no transpose, no HBM round-trip)
    return out.reshape(N, Cout, H, W)


def init_params(key, in_channels, out_channels, C=16, eps=1e-5):
    """Deterministic synthetic parameters (kaiming-uniform convs, BN folded)."""
    ks = jax.random.split(key, 16)

    def kaiming(k, shape, fan_in):
        bound = (6.0 / fan_in) ** 0.5
        return jax.random.uniform(k, shape, jnp.float32, -bound, bound)

    # Conv weights stored HWIO (ky, kx, cin, cout); PyTorch OIHW is equivalent
    # up to this transposition.
    w1 = kaiming(ks[0], (3, 3, in_channels, C), 9 * in_channels)
    w2 = kaiming(ks[1], (3, 3, C, 2 * C), 9 * C)
    w3 = kaiming(ks[2], (2 * C, out_channels), 2 * C)
    b3 = jnp.zeros((1, out_channels), jnp.float32)            # init.zeros_(bias)

    def bn_fold(kg, kb, km, kv, c):
        # eval-mode BatchNorm: y = gamma*(x-mean)/sqrt(var+eps) + beta
        gamma = 1.0 + 0.1 * jax.random.normal(kg, (c,), jnp.float32)
        beta = 0.1 * jax.random.normal(kb, (c,), jnp.float32)
        mean = 0.1 * jax.random.normal(km, (c,), jnp.float32)
        var = jnp.abs(jax.random.normal(kv, (c,), jnp.float32)) + 0.5
        scale = gamma / jnp.sqrt(var + eps)
        bias = beta - mean * scale
        return scale.reshape(1, c), bias.reshape(1, c)

    s1, b1 = bn_fold(ks[3], ks[4], ks[5], ks[6], C)
    s2, b2 = bn_fold(ks[7], ks[8], ks[9], ks[10], 2 * C)
    return w1, s1, b1, w2, s2, b2, w3, b3


def seg3_reference(x_nchw, w1, s1, b1, w2, s2, b2, w3, b3):
    """Pure-JAX f32 reference (lax.conv) matching the PyTorch forward."""
    hp = jax.lax.Precision.HIGHEST
    x = jnp.transpose(x_nchw, (0, 2, 3, 1))
    dn1 = jax.lax.conv_dimension_numbers(x.shape, w1.shape,
                                         ('NHWC', 'HWIO', 'NHWC'))
    h = jax.lax.conv_general_dilated(x, w1, (1, 1), 'SAME',
                                     dimension_numbers=dn1, precision=hp)
    h = jnp.maximum(h * s1[0] + b1[0], 0.0)
    dn2 = jax.lax.conv_dimension_numbers(h.shape, w2.shape,
                                         ('NHWC', 'HWIO', 'NHWC'))
    h = jax.lax.conv_general_dilated(h, w2, (1, 1), 'SAME',
                                     dimension_numbers=dn2, precision=hp)
    h = jnp.maximum(h * s2[0] + b2[0], 0.0)
    out = jnp.einsum('nhwc,co->nhwo', h, w3, precision=hp) + b3[0]
    return jnp.transpose(out, (0, 3, 1, 2))


if __name__ == "__main__":
    key = jax.random.PRNGKey(0)
    k_x, k_p = jax.random.split(key)

    N, IN_CH, OUT_CH, H, W, C = 2, 4, 3, 16, 16, 16
    x = jax.random.normal(k_x, (N, IN_CH, H, W), jnp.float32)   # NCHW like PyTorch
    params = init_params(k_p, IN_CH, OUT_CH, C=C)

    y = jax.block_until_ready(seg3_forward(x, *params))
    y_ref = jax.block_until_ready(seg3_reference(x, *params))

    assert y.shape == (N, OUT_CH, H, W), y.shape
    # Tolerance accounts for bf16 MXU operands (f32 accumulation) vs the exact
    # f32 reference; typical max abs error is ~1e-2 at these magnitudes.
    err = float(jnp.max(jnp.abs(y - y_ref)))
    assert jnp.allclose(y, y_ref, atol=5e-2, rtol=5e-2), err

    print("KERNEL_OK")
</pallas_src>

<mosaic_0001>
module attributes {stable_mosaic.version = 11 : i64} {
  func.func @_seg3_kernel(%arg0: i32, %arg1: memref<1x4x256xf32, #tpu.memory_space<vmem>>, %arg2: memref<9x1x256xf32, #tpu.memory_space<vmem>>, %arg3: memref<16x36xbf16, #tpu.memory_space<vmem>>, %arg4: memref<16x1xf32, #tpu.memory_space<vmem>>, %arg5: memref<32x144xbf16, #tpu.memory_space<vmem>>, %arg6: memref<32x1xf32, #tpu.memory_space<vmem>>, %arg7: memref<3x32xbf16, #tpu.memory_space<vmem>>, %arg8: memref<3x1xf32, #tpu.memory_space<vmem>>, %arg9: memref<1x3x256xf32, #tpu.memory_space<vmem>>, %arg10: memref<36x256xf32, #tpu.memory_space<vmem>>, %arg11: memref<144x256xf32, #tpu.memory_space<vmem>>) attributes {dimension_semantics = [#tpu.dimension_semantics<parallel>], iteration_bounds = array<i64: 2>, scalar_prefetch = 0 : i64, scratch_operands = 2 : i64, tpu.core_type = #tpu.core_type<tc>, window_params = [{transform_indices = @transform_0, window_bounds = array<i64: 1, 4, 256>}, {pipeline_mode = #tpu.pipeline_mode<synchronous>, transform_indices = @transform_1, window_bounds = array<i64: 9, 1, 256>}, {pipeline_mode = #tpu.pipeline_mode<synchronous>, transform_indices = @transform_2, window_bounds = array<i64: 16, 36>}, {pipeline_mode = #tpu.pipeline_mode<synchronous>, transform_indices = @transform_3, window_bounds = array<i64: 16, 1>}, {pipeline_mode = #tpu.pipeline_mode<synchronous>, transform_indices = @transform_4, window_bounds = array<i64: 32, 144>}, {pipeline_mode = #tpu.pipeline_mode<synchronous>, transform_indices = @transform_5, window_bounds = array<i64: 32, 1>}, {pipeline_mode = #tpu.pipeline_mode<synchronous>, transform_indices = @transform_6, window_bounds = array<i64: 3, 32>}, {pipeline_mode = #tpu.pipeline_mode<synchronous>, transform_indices = @transform_7, window_bounds = array<i64: 3, 1>}, {transform_indices = @transform_8, window_bounds = array<i64: 1, 3, 256>}]} {
    %c0 = arith.constant 0 : index
    %c0_0 = arith.constant 0 : index
    %c0_1 = arith.constant 0 : index
    %0 = vector.load %arg1[%c0, %c0_0, %c0_1] : memref<1x4x256xf32, #tpu.memory_space<vmem>>, vector<1x4x256xf32>
    %1 = vector.shape_cast %0 : vector<1x4x256xf32> to vector<4x256xf32>
    %c17_i32 = arith.constant 17 : i32
    %2 = tpu.dynamic_rotate %1 by %c17_i32 dim 1 : vector<4x256xf32>, i32 -> vector<4x256xf32>
    %c0_2 = arith.constant 0 : index
    %c0_3 = arith.constant 0 : index
    %c0_4 = arith.constant 0 : index
    %3 = vector.load %arg2[%c0_2, %c0_3, %c0_4] : memref<9x1x256xf32, #tpu.memory_space<vmem>>, vector<1x1x256xf32>
    %4 = vector.shape_cast %3 : vector<1x1x256xf32> to vector<1x256xf32>
    %5 = vector.broadcast %4 : vector<1x256xf32> to vector<4x256xf32>
    %6 = arith.mulf %2, %5 : vector<4x256xf32>
    %c0_5 = arith.constant 0 : index
    %c0_6 = arith.constant 0 : index
    %7 = vector.load %arg10[%c0_5, %c0_6] : memref<36x256xf32, #tpu.memory_space<vmem>>, vector<4x256xf32>
    tpu.vector_store %arg10[%c0_5, %c0_6], %6 {strides = array<i32>} : memref<36x256xf32, #tpu.memory_space<vmem>>, vector<4x256xf32>,
    %c16_i32 = arith.constant 16 : i32
    %8 = tpu.dynamic_rotate %1 by %c16_i32 dim 1 : vector<4x256xf32>, i32 -> vector<4x256xf32>
    %c1 = arith.constant 1 : index
    %c0_7 = arith.constant 0 : index
    %c0_8 = arith.constant 0 : index
    %9 = vector.load %arg2[%c1, %c0_7, %c0_8] : memref<9x1x256xf32, #tpu.memory_space<vmem>>, vector<1x1x256xf32>
    %10 = vector.shape_cast %9 : vector<1x1x256xf32> to vector<1x256xf32>
    %11 = vector.broadcast %10 : vector<1x256xf32> to vector<4x256xf32>
    %12 = arith.mulf %8, %11 : vector<4x256xf32>
    %c4 = arith.constant 4 : index
    %c0_9 = arith.constant 0 : index
    %13 = vector.load %arg10[%c4, %c0_9] : memref<36x256xf32, #tpu.memory_space<vmem>>, vector<4x256xf32>
    tpu.vector_store %arg10[%c4, %c0_9], %12 {strides = array<i32>} : memref<36x256xf32, #tpu.memory_space<vmem>>, vector<4x256xf32>,
    %c15_i32 = arith.constant 15 : i32
    %14 = tpu.dynamic_rotate %1 by %c15_i32 dim 1 : vector<4x256xf32>, i32 -> vector<4x256xf32>
    %c2 = arith.constant 2 : index
    %c0_10 = arith.constant 0 : index
    %c0_11 = arith.constant 0 : index
    %15 = vector.load %arg2[%c2, %c0_10, %c0_11] : memref<9x1x256xf32, #tpu.memory_space<vmem>>, vector<1x1x256xf32>
    %16 = vector.shape_cast %15 : vector<1x1x256xf32> to vector<1x256xf32>
    %17 = vector.broadcast %16 : vector<1x256xf32> to vector<4x256xf32>
    %18 = arith.mulf %14, %17 : vector<4x256xf32>
    %c8 = arith.constant 8 : index
    %c0_12 = arith.constant 0 : index
    %19 = vector.load %arg10[%c8, %c0_12] : memref<36x256xf32, #tpu.memory_space<vmem>>, vector<4x256xf32>
    tpu.vector_store %arg10[%c8, %c0_12], %18 {strides = array<i32>} : memref<36x256xf32, #tpu.memory_space<vmem>>, vector<4x256xf32>,
    %c1_i32 = arith.constant 1 : i32
    %20 = tpu.dynamic_rotate %1 by %c1_i32 dim 1 : vector<4x256xf32>, i32 -> vector<4x256xf32>
    %c3 = arith.constant 3 : index
    %c0_13 = arith.constant 0 : index
    %c0_14 = arith.constant 0 : index
    %21 = vector.load %arg2[%c3, %c0_13, %c0_14] : memref<9x1x256xf32, #tpu.memory_space<vmem>>, vector<1x1x256xf32>
    %22 = vector.shape_cast %21 : vector<1x1x256xf32> to vector<1x256xf32>
    %23 = vector.broadcast %22 : vector<1x256xf32> to vector<4x256xf32>
    %24 = arith.mulf %20, %23 : vector<4x256xf32>
    %c12 = arith.constant 12 : index
    %c0_15 = arith.constant 0 : index
    %25 = vector.load %arg10[%c12, %c0_15] : memref<36x256xf32, #tpu.memory_space<vmem>>, vector<4x256xf32>
    tpu.vector_store %arg10[%c12, %c0_15], %24 {strides = array<i32>} : memref<36x256xf32, #tpu.memory_space<vmem>>, vector<4x256xf32>,
    %c16 = arith.constant 16 : index
    %c0_16 = arith.constant 0 : index
    %26 = vector.load %arg10[%c16, %c0_16] : memref<36x256xf32, #tpu.memory_space<vmem>>, vector<4x256xf32>
    tpu.vector_store %arg10[%c16, %c0_16], %1 {strides = array<i32>} : memref<36x256xf32, #tpu.memory_space<vmem>>, vector<4x256xf32>,
    %c255_i32 = arith.constant 255 : i32
    %27 = tpu.dynamic_rotate %1 by %c255_i32 dim 1 : vector<4x256xf32>, i32 -> vector<4x256xf32>
    %c5 = arith.constant 5 : index
    %c0_17 = arith.constant 0 : index
    %c0_18 = arith.constant 0 : index
    %28 = vector.load %arg2[%c5, %c0_17, %c0_18] : memref<9x1x256xf32, #tpu.memory_space<vmem>>, vector<1x1x256xf32>
    %29 = vector.shape_cast %28 : vector<1x1x256xf32> to vector<1x256xf32>
    %30 = vector.broadcast %29 : vector<1x256xf32> to vector<4x256xf32>
    %31 = arith.mulf %27, %30 : vector<4x256xf32>
    %c20 = arith.constant 20 : index
    %c0_19 = arith.constant 0 : index
    %32 = vector.load %arg10[%c20, %c0_19] : memref<36x256xf32, #tpu.memory_space<vmem>>, vector<4x256xf32>
    tpu.vector_store %arg10[%c20, %c0_19], %31 {strides = array<i32>} : memref<36x256xf32, #tpu.memory_space<vmem>>, vector<4x256xf32>,
    %c241_i32 = arith.constant 241 : i32
    %33 = tpu.dynamic_rotate %1 by %c241_i32 dim 1 : vector<4x256xf32>, i32 -> vector<4x256xf32>
    %c6 = arith.constant 6 : index
    %c0_20 = arith.constant 0 : index
    %c0_21 = arith.constant 0 : index
    %34 = vector.load %arg2[%c6, %c0_20, %c0_21] : memref<9x1x256xf32, #tpu.memory_space<vmem>>, vector<1x1x256xf32>
    %35 = vector.shape_cast %34 : vector<1x1x256xf32> to vector<1x256xf32>
    %36 = vector.broadcast %35 : vector<1x256xf32> to vector<4x256xf32>
    %37 = arith.mulf %33, %36 : vector<4x256xf32>
    %c24 = arith.constant 24 : index
    %c0_22 = arith.constant 0 : index
    %38 = vector.load %arg10[%c24, %c0_22] : memref<36x256xf32, #tpu.memory_space<vmem>>, vector<4x256xf32>
    tpu.vector_store %arg10[%c24, %c0_22], %37 {strides = array<i32>} : memref<36x256xf32, #tpu.memory_space<vmem>>, vector<4x256xf32>,
    %c240_i32 = arith.constant 240 : i32
    %39 = tpu.dynamic_rotate %1 by %c240_i32 dim 1 : vector<4x256xf32>, i32 -> vector<4x256xf32>
    %c7 = arith.constant 7 : index
    %c0_23 = arith.constant 0 : index
    %c0_24 = arith.constant 0 : index
    %40 = vector.load %arg2[%c7, %c0_23, %c0_24] : memref<9x1x256xf32, #tpu.memory_space<vmem>>, vector<1x1x256xf32>
    %41 = vector.shape_cast %40 : vector<1x1x256xf32> to vector<1x256xf32>
    %42 = vector.broadcast %41 : vector<1x256xf32> to vector<4x256xf32>
    %43 = arith.mulf %39, %42 : vector<4x256xf32>
    %c28 = arith.constant 28 : index
    %c0_25 = arith.constant 0 : index
    %44 = vector.load %arg10[%c28, %c0_25] : memref<36x256xf32, #tpu.memory_space<vmem>>, vector<4x256xf32>
    tpu.vector_store %arg10[%c28, %c0_25], %43 {strides = array<i32>} : memref<36x256xf32, #tpu.memory_space<vmem>>, vector<4x256xf32>,
    %c239_i32 = arith.constant 239 : i32
    %45 = tpu.dynamic_rotate %1 by %c239_i32 dim 1 : vector<4x256xf32>, i32 -> vector<4x256xf32>
    %c8_26 = arith.constant 8 : index
    %c0_27 = arith.constant 0 : index
    %c0_28 = arith.constant 0 : index
    %46 = vector.load %arg2[%c8_26, %c0_27, %c0_28] : memref<9x1x256xf32, #tpu.memory_space<vmem>>, vector<1x1x256xf32>
    %47 = vector.shape_cast %46 : vector<1x1x256xf32> to vector<1x256xf32>
    %48 = vector.broadcast %47 : vector<1x256xf32> to vector<4x256xf32>
    %49 = arith.mulf %45, %48 : vector<4x256xf32>
    %c32 = arith.constant 32 : index
    %c0_29 = arith.constant 0 : index
    %50 = vector.load %arg10[%c32, %c0_29] : memref<36x256xf32, #tpu.memory_space<vmem>>, vector<4x256xf32>
    tpu.vector_store %arg10[%c32, %c0_29], %49 {strides = array<i32>} : memref<36x256xf32, #tpu.memory_space<vmem>>, vector<4x256xf32>,
    %c0_30 = arith.constant 0 : index
    %c0_31 = arith.constant 0 : index
    %51 = vector.load %arg10[%c0_30, %c0_31] : memref<36x256xf32, #tpu.memory_space<vmem>>, vector<36x256xf32>
    %52 = arith.truncf %51 : vector<36x256xf32> to vector<36x256xbf16>
    %c0_32 = arith.constant 0 : index
    %c0_33 = arith.constant 0 : index
    %53 = vector.load %arg3[%c0_32, %c0_33] : memref<16x36xbf16, #tpu.memory_space<vmem>>, vector<16x36xbf16>
    %cst = arith.constant dense<0.000000e+00> : vector<16x256xf32>
    %54 = tpu.matmul %53, %52, %cst {dimension_numbers = #tpu.dot_dimension_numbers<[1], [0], [0], [1], [0, 0, 1, 1], [], []>} : vector<16x36xbf16>, vector<36x256xbf16>, vector<16x256xf32> -> vector<16x256xf32>
    %c0_34 = arith.constant 0 : index
    %c0_35 = arith.constant 0 : index
    %55 = vector.load %arg4[%c0_34, %c0_35] : memref<16x1xf32, #tpu.memory_space<vmem>>, vector<16x1xf32>
    %56 = vector.broadcast %55 : vector<16x1xf32> to vector<16x256xf32>
    %57 = arith.addf %54, %56 : vector<16x256xf32>
    %cst_36 = arith.constant 0.000000e+00 : f32
    %58 = vector.broadcast %cst_36 : f32 to vector<16x256xf32>
    %59 = arith.maximumf %57, %58 : vector<16x256xf32>
    %c17_i32_37 = arith.constant 17 : i32
    %60 = tpu.dynamic_rotate %59 by %c17_i32_37 dim 1 : vector<16x256xf32>, i32 -> vector<16x256xf32>
    %c0_38 = arith.constant 0 : index
    %c0_39 = arith.constant 0 : index
    %c0_40 = arith.constant 0 : index
    %61 = vector.load %arg2[%c0_38, %c0_39, %c0_40] : memref<9x1x256xf32, #tpu.memory_space<vmem>>, vector<1x1x256xf32>
    %62 = vector.shape_cast %61 : vector<1x1x256xf32> to vector<1x256xf32>
    %63 = vector.broadcast %62 : vector<1x256xf32> to vector<16x256xf32>
    %64 = arith.mulf %60, %63 : vector<16x256xf32>
    %c0_41 = arith.constant 0 : index
    %c0_42 = arith.constant 0 : index
    %65 = vector.load %arg11[%c0_41, %c0_42] : memref<144x256xf32, #tpu.memory_space<vmem>>, vector<16x256xf32>
    tpu.vector_store %arg11[%c0_41, %c0_42], %64 {strides = array<i32>} : memref<144x256xf32, #tpu.memory_space<vmem>>, vector<16x256xf32>,
    %c16_i32_43 = arith.constant 16 : i32
    %66 = tpu.dynamic_rotate %59 by %c16_i32_43 dim 1 : vector<16x256xf32>, i32 -> vector<16x256xf32>
    %c1_44 = arith.constant 1 : index
    %c0_45 = arith.constant 0 : index
    %c0_46 = arith.constant 0 : index
    %67 = vector.load %arg2[%c1_44, %c0_45, %c0_46] : memref<9x1x256xf32, #tpu.memory_space<vmem>>, vector<1x1x256xf32>
    %68 = vector.shape_cast %67 : vector<1x1x256xf32> to vector<1x256xf32>
    %69 = vector.broadcast %68 : vector<1x256xf32> to vector<16x256xf32>
    %70 = arith.mulf %66, %69 : vector<16x256xf32>
    %c16_47 = arith.constant 16 : index
    %c0_48 = arith.constant 0 : index
    %71 = vector.load %arg11[%c16_47, %c0_48] : memref<144x256xf32, #tpu.memory_space<vmem>>, vector<16x256xf32>
    tpu.vector_store %arg11[%c16_47, %c0_48], %70 {strides = array<i32>} : memref<144x256xf32, #tpu.memory_space<vmem>>, vector<16x256xf32>,
    %c15_i32_49 = arith.constant 15 : i32
    %72 = tpu.dynamic_rotate %59 by %c15_i32_49 dim 1 : vector<16x256xf32>, i32 -> vector<16x256xf32>
    %c2_50 = arith.constant 2 : index
    %c0_51 = arith.constant 0 : index
    %c0_52 = arith.constant 0 : index
    %73 = vector.load %arg2[%c2_50, %c0_51, %c0_52] : memref<9x1x256xf32, #tpu.memory_space<vmem>>, vector<1x1x256xf32>
    %74 = vector.shape_cast %73 : vector<1x1x256xf32> to vector<1x256xf32>
    %75 = vector.broadcast %74 : vector<1x256xf32> to vector<16x256xf32>
    %76 = arith.mulf %72, %75 : vector<16x256xf32>
    %c32_53 = arith.constant 32 : index
    %c0_54 = arith.constant 0 : index
    %77 = vector.load %arg11[%c32_53, %c0_54] : memref<144x256xf32, #tpu.memory_space<vmem>>, vector<16x256xf32>
    tpu.vector_store %arg11[%c32_53, %c0_54], %76 {strides = array<i32>} : memref<144x256xf32, #tpu.memory_space<vmem>>, vector<16x256xf32>,
    %c1_i32_55 = arith.constant 1 : i32
    %78 = tpu.dynamic_rotate %59 by %c1_i32_55 dim 1 : vector<16x256xf32>, i32 -> vector<16x256xf32>
    %c3_56 = arith.constant 3 : index
    %c0_57 = arith.constant 0 : index
    %c0_58 = arith.constant 0 : index
    %79 = vector.load %arg2[%c3_56, %c0_57, %c0_58] : memref<9x1x256xf32, #tpu.memory_space<vmem>>, vector<1x1x256xf32>
    %80 = vector.shape_cast %79 : vector<1x1x256xf32> to vector<1x256xf32>
    %81 = vector.broadcast %80 : vector<1x256xf32> to vector<16x256xf32>
    %82 = arith.mulf %78, %81 : vector<16x256xf32>
    %c48 = arith.constant 48 : index
    %c0_59 = arith.constant 0 : index
    %83 = vector.load %arg11[%c48, %c0_59] : memref<144x256xf32, #tpu.memory_space<vmem>>, vector<16x256xf32>
    tpu.vector_store %arg11[%c48, %c0_59], %82 {strides = array<i32>} : memref<144x256xf32, #tpu.memory_space<vmem>>, vector<16x256xf32>,
    %c64 = arith.constant 64 : index
    %c0_60 = arith.constant 0 : index
    %84 = vector.load %arg11[%c64, %c0_60] : memref<144x256xf32, #tpu.memory_space<vmem>>, vector<16x256xf32>
    tpu.vector_store %arg11[%c64, %c0_60], %59 {strides = array<i32>} : memref<144x256xf32, #tpu.memory_space<vmem>>, vector<16x256xf32>,
    %c255_i32_61 = arith.constant 255 : i32
    %85 = tpu.dynamic_rotate %59 by %c255_i32_61 dim 1 : vector<16x256xf32>, i32 -> vector<16x256xf32>
    %c5_62 = arith.constant 5 : index
    %c0_63 = arith.constant 0 : index
    %c0_64 = arith.constant 0 : index
    %86 = vector.load %arg2[%c5_62, %c0_63, %c0_64] : memref<9x1x256xf32, #tpu.memory_space<vmem>>, vector<1x1x256xf32>
    %87 = vector.shape_cast %86 : vector<1x1x256xf32> to vector<1x256xf32>
    %88 = vector.broadcast %87 : vector<1x256xf32> to vector<16x256xf32>
    %89 = arith.mulf %85, %88 : vector<16x256xf32>
    %c80 = arith.constant 80 : index
    %c0_65 = arith.constant 0 : index
    %90 = vector.load %arg11[%c80, %c0_65] : memref<144x256xf32, #tpu.memory_space<vmem>>, vector<16x256xf32>
    tpu.vector_store %arg11[%c80, %c0_65], %89 {strides = array<i32>} : memref<144x256xf32, #tpu.memory_space<vmem>>, vector<16x256xf32>,
    %c241_i32_66 = arith.constant 241 : i32
    %91 = tpu.dynamic_rotate %59 by %c241_i32_66 dim 1 : vector<16x256xf32>, i32 -> vector<16x256xf32>
    %c6_67 = arith.constant 6 : index
    %c0_68 = arith.constant 0 : index
    %c0_69 = arith.constant 0 : index
    %92 = vector.load %arg2[%c6_67, %c0_68, %c0_69] : memref<9x1x256xf32, #tpu.memory_space<vmem>>, vector<1x1x256xf32>
    %93 = vector.shape_cast %92 : vector<1x1x256xf32> to vector<1x256xf32>
    %94 = vector.broadcast %93 : vector<1x256xf32> to vector<16x256xf32>
    %95 = arith.mulf %91, %94 : vector<16x256xf32>
    %c96 = arith.constant 96 : index
    %c0_70 = arith.constant 0 : index
    %96 = vector.load %arg11[%c96, %c0_70] : memref<144x256xf32, #tpu.memory_space<vmem>>, vector<16x256xf32>
    tpu.vector_store %arg11[%c96, %c0_70], %95 {strides = array<i32>} : memref<144x256xf32, #tpu.memory_space<vmem>>, vector<16x256xf32>,
    %c240_i32_71 = arith.constant 240 : i32
    %97 = tpu.dynamic_rotate %59 by %c240_i32_71 dim 1 : vector<16x256xf32>, i32 -> vector<16x256xf32>
    %c7_72 = arith.constant 7 : index
    %c0_73 = arith.constant 0 : index
    %c0_74 = arith.constant 0 : index
    %98 = vector.load %arg2[%c7_72, %c0_73, %c0_74] : memref<9x1x256xf32, #tpu.memory_space<vmem>>, vector<1x1x256xf32>
    %99 = vector.shape_cast %98 : vector<1x1x256xf32> to vector<1x256xf32>
    %100 = vector.broadcast %99 : vector<1x256xf32> to vector<16x256xf32>
    %101 = arith.mulf %97, %100 : vector<16x256xf32>
    %c112 = arith.constant 112 : index
    %c0_75 = arith.constant 0 : index
    %102 = vector.load %arg11[%c112, %c0_75] : memref<144x256xf32, #tpu.memory_space<vmem>>, vector<16x256xf32>
    tpu.vector_store %arg11[%c112, %c0_75], %101 {strides = array<i32>} : memref<144x256xf32, #tpu.memory_space<vmem>>, vector<16x256xf32>,
    %c239_i32_76 = arith.constant 239 : i32
    %103 = tpu.dynamic_rotate %59 by %c239_i32_76 dim 1 : vector<16x256xf32>, i32 -> vector<16x256xf32>
    %c8_77 = arith.constant 8 : index
    %c0_78 = arith.constant 0 : index
    %c0_79 = arith.constant 0 : index
    %104 = vector.load %arg2[%c8_77, %c0_78, %c0_79] : memref<9x1x256xf32, #tpu.memory_space<vmem>>, vector<1x1x256xf32>
    %105 = vector.shape_cast %104 : vector<1x1x256xf32> to vector<1x256xf32>
    %106 = vector.broadcast %105 : vector<1x256xf32> to vector<16x256xf32>
    %107 = arith.mulf %103, %106 : vector<16x256xf32>
    %c128 = arith.constant 128 : index
    %c0_80 = arith.constant 0 : index
    %108 = vector.load %arg11[%c128, %c0_80] : memref<144x256xf32, #tpu.memory_space<vmem>>, vector<16x256xf32>
    tpu.vector_store %arg11[%c128, %c0_80], %107 {strides = array<i32>} : memref<144x256xf32, #tpu.memory_space<vmem>>, vector<16x256xf32>,
    %c0_81 = arith.constant 0 : index
    %c0_82 = arith.constant 0 : index
    %109 = vector.load %arg11[%c0_81, %c0_82] : memref<144x256xf32, #tpu.memory_space<vmem>>, vector<144x256xf32>
    %110 = arith.truncf %109 : vector<144x256xf32> to vector<144x256xbf16>
    %c0_83 = arith.constant 0 : index
    %c0_84 = arith.constant 0 : index
    %111 = vector.load %arg5[%c0_83, %c0_84] : memref<32x144xbf16, #tpu.memory_space<vmem>>, vector<32x144xbf16>
    %cst_85 = arith.constant dense<0.000000e+00> : vector<32x256xf32>
    %112 = tpu.matmul %111, %110, %cst_85 {dimension_numbers = #tpu.dot_dimension_numbers<[1], [0], [0], [1], [0, 0, 1, 1], [], []>} : vector<32x144xbf16>, vector<144x256xbf16>, vector<32x256xf32> -> vector<32x256xf32>
    %c0_86 = arith.constant 0 : index
    %c0_87 = arith.constant 0 : index
    %113 = vector.load %arg6[%c0_86, %c0_87] : memref<32x1xf32, #tpu.memory_space<vmem>>, vector<32x1xf32>
    %114 = vector.broadcast %113 : vector<32x1xf32> to vector<32x256xf32>
    %115 = arith.addf %112, %114 : vector<32x256xf32>
    %cst_88 = arith.constant 0.000000e+00 : f32
    %116 = vector.broadcast %cst_88 : f32 to vector<32x256xf32>
    %117 = arith.maximumf %115, %116 : vector<32x256xf32>
    %c0_89 = arith.constant 0 : index
    %c0_90 = arith.constant 0 : index
    %118 = vector.load %arg7[%c0_89, %c0_90] : memref<3x32xbf16, #tpu.memory_space<vmem>>, vector<3x32xbf16>
    %119 = arith.truncf %117 : vector<32x256xf32> to vector<32x256xbf16>
    %cst_91 = arith.constant dense<0.000000e+00> : vector<3x256xf32>
    %120 = tpu.matmul %118, %119, %cst_91 {dimension_numbers = #tpu.dot_dimension_numbers<[1], [0], [0], [1], [0, 0, 1, 1], [], []>} : vector<3x32xbf16>, vector<32x256xbf16>, vector<3x256xf32> -> vector<3x256xf32>
    %c0_92 = arith.constant 0 : index
    %c0_93 = arith.constant 0 : index
    %121 = vector.load %arg8[%c0_92, %c0_93] : memref<3x1xf32, #tpu.memory_space<vmem>>, vector<3x1xf32>
    %122 = vector.broadcast %121 : vector<3x1xf32> to vector<3x256xf32>
    %123 = arith.addf %120, %122 : vector<3x256xf32>
    %c0_94 = arith.constant 0 : index
    %c0_95 = arith.constant 0 : index
    %c0_96 = arith.constant 0 : index
    %124 = vector.load %arg9[%c0_94, %c0_95, %c0_96] : memref<1x3x256xf32, #tpu.memory_space<vmem>>, vector<1x3x256xf32>
    %125 = vector.shape_cast %124 : vector<1x3x256xf32> to vector<3x256xf32>
    %126 = vector.shape_cast %123 : vector<3x256xf32> to vector<1x3x256xf32>
    tpu.vector_store %arg9[%c0_94, %c0_95, %c0_96], %126 {strides = array<i32>} : memref<1x3x256xf32, #tpu.memory_space<vmem>>, vector<1x3x256xf32>,
    return
  }
  func.func @transform_0(%arg0: i32) -> (i32, i32, i32) {
    %c0_i32 = arith.constant 0 : i32
    %c0_i32_0 = arith.constant 0 : i32
    %c0_i32_1 = arith.constant 0 : i32
    return %arg0, %c0_i32, %c0_i32_0 : i32, i32, i32
  }
  func.func @transform_1(%arg0: i32) -> (i32, i32, i32) {
    %c0_i32 = arith.constant 0 : i32
    %c0_i32_0 = arith.constant 0 : i32
    %c0_i32_1 = arith.constant 0 : i32
    %c0_i32_2 = arith.constant 0 : i32
    return %c0_i32, %c0_i32_0, %c0_i32_1 : i32, i32, i32
  }
  func.func @transform_2(%arg0: i32) -> (i32, i32) {
    %c0_i32 = arith.constant 0 : i32
    %c0_i32_0 = arith.constant 0 : i32
    %c0_i32_1 = arith.constant 0 : i32
    return %c0_i32, %c0_i32_0 : i32, i32
  }
  func.func @transform_3(%arg0: i32) -> (i32, i32) {
    %c0_i32 = arith.constant 0 : i32
    %c0_i32_0 = arith.constant 0 : i32
    %c0_i32_1 = arith.constant 0 : i32
    return %c0_i32, %c0_i32_0 : i32, i32
  }
  func.func @transform_4(%arg0: i32) -> (i32, i32) {
    %c0_i32 = arith.constant 0 : i32
    %c0_i32_0 = arith.constant 0 : i32
    %c0_i32_1 = arith.constant 0 : i32
    return %c0_i32, %c0_i32_0 : i32, i32
  }
  func.func @transform_5(%arg0: i32) -> (i32, i32) {
    %c0_i32 = arith.constant 0 : i32
    %c0_i32_0 = arith.constant 0 : i32
    %c0_i32_1 = arith.constant 0 : i32
    return %c0_i32, %c0_i32_0 : i32, i32
  }
  func.func @transform_6(%arg0: i32) -> (i32, i32) {
    %c0_i32 = arith.constant 0 : i32
    %c0_i32_0 = arith.constant 0 : i32
    %c0_i32_1 = arith.constant 0 : i32
    return %c0_i32, %c0_i32_0 : i32, i32
  }
  func.func @transform_7(%arg0: i32) -> (i32, i32) {
    %c0_i32 = arith.constant 0 : i32
    %c0_i32_0 = arith.constant 0 : i32
    %c0_i32_1 = arith.constant 0 : i32
    return %c0_i32, %c0_i32_0 : i32, i32
  }
  func.func @transform_8(%arg0: i32) -> (i32, i32, i32) {
    %c0_i32 = arith.constant 0 : i32
    %c0_i32_0 = arith.constant 0 : i32
    %c0_i32_1 = arith.constant 0 : i32
    return %arg0, %c0_i32, %c0_i32_0 : i32, i32, i32
  }
}

</mosaic_0001>

<llo_original>
// kernel: seg3_forward.1
$region0: #{seg3_forward.1}
  #allocation0 [shape = 'u32[]', space=smem, size = 0x4, offset = 0x4, fixed_abs, tag = 'smem constant byte address 0x4 - core index']
  #allocation1 [shape = 'u32[72,128]{1,0:T(1,128)}', space=vmem, size = 0x9000, scoped, tag = 'internal scratch']
  #allocation2 [shape = 'f32[36,256]{1,0:T(8,128)}', space=vmem, size = 0xa000, scoped, tag = 'scratch operand']
  #allocation3 [shape = 'f32[144,256]{1,0:T(8,128)}', space=vmem, size = 0x24000, scoped, tag = 'scratch operand']
  %s0 = inlined_call_operand.vmem [shape: f32[2,4,256], index: 0, kind: input, shape index: {}]
  %s1 = inlined_call_operand.vmem [shape: f32[9,1,256], index: 1, kind: input, shape index: {}]
  %s2 = inlined_call_operand.vmem [shape: bf16[16,36], index: 2, kind: input, shape index: {}]
  %s3 = inlined_call_operand.vmem [shape: f32[16,1], index: 3, kind: input, shape index: {}]
  %s4 = inlined_call_operand.vmem [shape: bf16[32,144], index: 4, kind: input, shape index: {}]
  %s5 = inlined_call_operand.vmem [shape: f32[32,1], index: 5, kind: input, shape index: {}]
  %s6 = inlined_call_operand.vmem [shape: bf16[3,32], index: 6, kind: input, shape index: {}]
  %s7 = inlined_call_operand.vmem [shape: f32[3,1], index: 7, kind: input, shape index: {}]
  %s8 = inlined_call_operand.vmem [shape: f32[2,3,256], index: 8, kind: output, shape index: {}]
  %s9 = sld [smem:[#allocation0]]
  $region65: #{seg3_forward.1} parent=0
    _
  %s11 = ssub.s32 1, %s9
  %s12 = scalar_select 0, %s11, %s9
  loop: start=0, step=1, limit=4
  $region2: #{seg3_forward.1} parent=0 // loop_pre_header
    _
  $region3: #{seg3_forward.1} parent=0 // loop_header
    %s14 = sphi 0, %s18
    %p15 = scmp.ge.s32.totalorder %s14, 4
    %s24 = sphi 0, %s26
    %s27 = sphi 0, %s24
    %s28 = sphi 0, %s27
    %s44 = sphi 0, %s28
    %s48 = sphi 0, %s48
    %s50 = sphi 0, %s48
    %s51 = sphi 0, %s50
    %s65 = sphi 0, %s51
    %s69 = sphi 0, %s69
    %s71 = sphi 0, %s69
    %s72 = sphi 0, %s71
    %s86 = sphi 0, %s72
    %s90 = sphi 0, %s90
    %s92 = sphi 0, %s90
    %s93 = sphi 0, %s92
    %s107 = sphi 0, %s93
    %s111 = sphi 0, %s111
    %s113 = sphi 0, %s111
    %s114 = sphi 0, %s113
    %s128 = sphi 0, %s114
    %s132 = sphi 0, %s132
    %s134 = sphi 0, %s132
    %s135 = sphi 0, %s134
    %s149 = sphi 0, %s135
    %s153 = sphi 0, %s153
    %s155 = sphi 0, %s153
    %s156 = sphi 0, %s155
    %s170 = sphi 0, %s156
    %s174 = sphi 0, %s174
    %s176 = sphi 0, %s174
    %s177 = sphi 0, %s176
    %s191 = sphi 0, %s177
    %s197 = sphi 0, %s199
    %s200 = sphi 0, %s197
    %s201 = sphi 0, %s200
    %s217 = sphi 0, %s201
  $region4: #{seg3_forward.1} parent=0 // loop_header_branch
    %17 = sbr.rel (%p15) target = $region8
  $region5: #{seg3_forward.1} parent=0 // loop_body
    %s19 = ssub.s32 %s14, 1
    %s20 = ssub.s32 %s14, 2
    %s21 = sadd.s32 %s14, 1
    %s22 = ssub.s32 %s14, %s21
    %p23 = scmp.eq.s32.totalorder %s22, 0
    %s25 = sadd.s32 %s24, 1
    %s26 = scalar_select %p23, %s24, %s25
    %p29 = pneg %p23
    %p30 = scmp.eq.s32.totalorder %s14, 1
    %p31 = por %p29, %p30
    %p32 = scmp.ne.s32.totalorder %s24, %s27
    %p33 = scmp.eq.s32.totalorder %s14, 0
    %p34 = por %p32, %p33
    %p35 = scmp.ne.s32.totalorder %s24, %s27
    %p36 = scmp.eq.s32.totalorder %s19, 1
    %p37 = por %p35, %p36
    %p38 = scmp.ne.s32.totalorder %s27, %s28
    %p39 = scmp.eq.s32.totalorder %s19, 0
    %p40 = por %p38, %p39
    %p41 = scmp.ne.s32.totalorder %s27, %s28
    %p42 = scmp.eq.s32.totalorder %s20, 1
    %p43 = por %p41, %p42
    %p45 = scmp.ne.s32.totalorder %s28, %s44
    %p46 = scmp.eq.s32.totalorder %s20, 0
    %p47 = por %p45, %p46
    %s49 = sadd.s32 %s48, 1
    %p52 = scmp.eq.s32.totalorder %s14, 1
    %p53 = scmp.ne.s32.totalorder %s48, %s50
    %p54 = scmp.eq.s32.totalorder %s14, 0
    %p55 = por %p53, %p54
    %p56 = scmp.ne.s32.totalorder %s48, %s50
    %p57 = scmp.eq.s32.totalorder %s19, 1
    %p58 = por %p56, %p57
    %p59 = scmp.ne.s32.totalorder %s50, %s51
    %p60 = scmp.eq.s32.totalorder %s19, 0
    %p61 = por %p59, %p60
    %p62 = scmp.ne.s32.totalorder %s50, %s51
    %p63 = scmp.eq.s32.totalorder %s20, 1
    %p64 = por %p62, %p63
    %p66 = scmp.ne.s32.totalorder %s51, %s65
    %p67 = scmp.eq.s32.totalorder %s20, 0
    %p68 = por %p66, %p67
    %s70 = sadd.s32 %s69, 1
    %p73 = scmp.eq.s32.totalorder %s14, 1
    %p74 = scmp.ne.s32.totalorder %s69, %s71
    %p75 = scmp.eq.s32.totalorder %s14, 0
    %p76 = por %p74, %p75
    %p77 = scmp.ne.s32.totalorder %s69, %s71
    %p78 = scmp.eq.s32.totalorder %s19, 1
    %p79 = por %p77, %p78
    %p80 = scmp.ne.s32.totalorder %s71, %s72
    %p81 = scmp.eq.s32.totalorder %s19, 0
    %p82 = por %p80, %p81
    %p83 = scmp.ne.s32.totalorder %s71, %s72
    %p84 = scmp.eq.s32.totalorder %s20, 1
    %p85 = por %p83, %p84
    %p87 = scmp.ne.s32.totalorder %s72, %s86
    %p88 = scmp.eq.s32.totalorder %s20, 0
    %p89 = por %p87, %p88
    %s91 = sadd.s32 %s90, 1
    %p94 = scmp.eq.s32.totalorder %s14, 1
    %p95 = scmp.ne.s32.totalorder %s90, %s92
    %p96 = scmp.eq.s32.totalorder %s14, 0
    %p97 = por %p95, %p96
    %p98 = scmp.ne.s32.totalorder %s90, %s92
    %p99 = scmp.eq.s32.totalorder %s19, 1
    %p100 = por %p98, %p99
    %p101 = scmp.ne.s32.totalorder %s92, %s93
    %p102 = scmp.eq.s32.totalorder %s19, 0
    %p103 = por %p101, %p102
    %p104 = scmp.ne.s32.totalorder %s92, %s93
    %p105 = scmp.eq.s32.totalorder %s20, 1
    %p106 = por %p104, %p105
    %p108 = scmp.ne.s32.totalorder %s93, %s107
    %p109 = scmp.eq.s32.totalorder %s20, 0
    %p110 = por %p108, %p109
    %s112 = sadd.s32 %s111, 1
    %p115 = scmp.eq.s32.totalorder %s14, 1
    %p116 = scmp.ne.s32.totalorder %s111, %s113
    %p117 = scmp.eq.s32.totalorder %s14, 0
    %p118 = por %p116, %p117
    %p119 = scmp.ne.s32.totalorder %s111, %s113
    %p120 = scmp.eq.s32.totalorder %s19, 1
    %p121 = por %p119, %p120
    %p122 = scmp.ne.s32.totalorder %s113, %s114
    %p123 = scmp.eq.s32.totalorder %s19, 0
    %p124 = por %p122, %p123
    %p125 = scmp.ne.s32.totalorder %s113, %s114
    %p126 = scmp.eq.s32.totalorder %s20, 1
    %p127 = por %p125, %p126
    %p129 = scmp.ne.s32.totalorder %s114, %s128
    %p130 = scmp.eq.s32.totalorder %s20, 0
    %p131 = por %p129, %p130
    %s133 = sadd.s32 %s132, 1
    %p136 = scmp.eq.s32.totalorder %s14, 1
    %p137 = scmp.ne.s32.totalorder %s132, %s134
    %p138 = scmp.eq.s32.totalorder %s14, 0
    %p139 = por %p137, %p138
    %p140 = scmp.ne.s32.totalorder %s132, %s134
    %p141 = scmp.eq.s32.totalorder %s19, 1
    %p142 = por %p140, %p141
    %p143 = scmp.ne.s32.totalorder %s134, %s135
    %p144 = scmp.eq.s32.totalorder %s19, 0
    %p145 = por %p143, %p144
    %p146 = scmp.ne.s32.totalorder %s134, %s135
    %p147 = scmp.eq.s32.totalorder %s20, 1
    %p148 = por %p146, %p147
    %p150 = scmp.ne.s32.totalorder %s135, %s149
    %p151 = scmp.eq.s32.totalorder %s20, 0
    %p152 = por %p150, %p151
    %s154 = sadd.s32 %s153, 1
    %p157 = scmp.eq.s32.totalorder %s14, 1
    %p158 = scmp.ne.s32.totalorder %s153, %s155
    %p159 = scmp.eq.s32.totalorder %s14, 0
    %p160 = por %p158, %p159
    %p161 = scmp.ne.s32.totalorder %s153, %s155
    %p162 = scmp.eq.s32.totalorder %s19, 1
    %p163 = por %p161, %p162
    %p164 = scmp.ne.s32.totalorder %s155, %s156
    %p165 = scmp.eq.s32.totalorder %s19, 0
    %p166 = por %p164, %p165
    %p167 = scmp.ne.s32.totalorder %s155, %s156
    %p168 = scmp.eq.s32.totalorder %s20, 1
    %p169 = por %p167, %p168
    %p171 = scmp.ne.s32.totalorder %s156, %s170
    %p172 = scmp.eq.s32.totalorder %s20, 0
    %p173 = por %p171, %p172
    %s175 = sadd.s32 %s174, 1
    %p178 = scmp.eq.s32.totalorder %s14, 1
    %p179 = scmp.ne.s32.totalorder %s174, %s176
    %p180 = scmp.eq.s32.totalorder %s14, 0
    %p181 = por %p179, %p180
    %p182 = scmp.ne.s32.totalorder %s174, %s176
    %p183 = scmp.eq.s32.totalorder %s19, 1
    %p184 = por %p182, %p183
    %p185 = scmp.ne.s32.totalorder %s176, %s177
    %p186 = scmp.eq.s32.totalorder %s19, 0
    %p187 = por %p185, %p186
    %p188 = scmp.ne.s32.totalorder %s176, %s177
    %p189 = scmp.eq.s32.totalorder %s20, 1
    %p190 = por %p188, %p189
    %p192 = scmp.ne.s32.totalorder %s177, %s191
    %p193 = scmp.eq.s32.totalorder %s20, 0
    %p194 = por %p192, %p193
    %s195 = ssub.s32 %s14, %s21
    %p196 = scmp.eq.s32.totalorder %s195, 0
    %s198 = sadd.s32 %s197, 1
    %s199 = scalar_select %p196, %s197, %s198
    %p202 = pneg %p196
    %p203 = scmp.eq.s32.totalorder %s14, 1
    %p204 = por %p202, %p203
    %p205 = scmp.ne.s32.totalorder %s197, %s200
    %p206 = scmp.eq.s32.totalorder %s14, 0
    %p207 = por %p205, %p206
    %p208 = scmp.ne.s32.totalorder %s197, %s200
    %p209 = scmp.eq.s32.totalorder %s19, 1
    %p210 = por %p208, %p209
    %p211 = scmp.ne.s32.totalorder %s200, %s201
    %p212 = scmp.eq.s32.totalorder %s19, 0
    %p213 = por %p211, %p212
    %p214 = scmp.ne.s32.totalorder %s200, %s201
    %p215 = scmp.eq.s32.totalorder %s20, 1
    %p216 = por %p214, %p215
    %p218 = scmp.ne.s32.totalorder %s201, %s217
    %p219 = scmp.eq.s32.totalorder %s20, 0
    %p220 = por %p218, %p219
    %p221 = scmp.le.s32.totalorder 1, %s14
    %p222 = scmp.lt.s32.totalorder %s14, 3
    %p223 = pnand %p221, %p222
    %p224 = pneg %p223
    // Predicated region
    $region9: #{seg3_forward.1} parent=5 // pred_check
      _
    $region10: #{seg3_forward.1} parent=5 // pred_check_branch
      %226 = sbr.rel (%p223) target = $region12
    $region11: #{seg3_forward.1} parent=5 // pred_region
      %s227 = ssub.s32 %s14, 1
      // Predicated region
      $region13: #{seg3_forward.1} parent=11 // pred_check
        %p228 = pneg %p61
      $region14: #{seg3_forward.1} parent=11 // pred_check_branch
        %230 = sbr.rel (%p228) target = $region16
      $region15: #{seg3_forward.1} parent=11 // pred_region
        _
      $region16: #{seg3_forward.1} parent=11 // pred_fallthru
        _
      // Predicated region
      $region17: #{seg3_forward.1} parent=11 // pred_check
        %p231 = pneg %p82
      $region18: #{seg3_forward.1} parent=11 // pred_check_branch
        %233 = sbr.rel (%p231) target = $region20
      $region19: #{seg3_forward.1} parent=11 // pred_region
        _
      $region20: #{seg3_forward.1} parent=11 // pred_fallthru
        _
      // Predicated region
      $region21: #{seg3_forward.1} parent=11 // pred_check
        %p234 = pneg %p103
      $region22: #{seg3_forward.1} parent=11 // pred_check_branch
        %236 = sbr.rel (%p234) target = $region24
      $region23: #{seg3_forward.1} parent=11 // pred_region
        _
      $region24: #{seg3_forward.1} parent=11 // pred_fallthru
        _
      // Predicated region
      $region25: #{seg3_forward.1} parent=11 // pred_check
        %p237 = pneg %p124
      $region26: #{seg3_forward.1} parent=11 // pred_check_branch
        %239 = sbr.rel (%p237) target = $region28
      $region27: #{seg3_forward.1} parent=11 // pred_region
        _
      $region28: #{seg3_forward.1} parent=11 // pred_fallthru
        _
      // Predicated region
      $region29: #{seg3_forward.1} parent=11 // pred_check
        %p240 = pneg %p145
      $region30: #{seg3_forward.1} parent=11 // pred_check_branch
        %242 = sbr.rel (%p240) target = $region32
      $region31: #{seg3_forward.1} parent=11 // pred_region
        _
      $region32: #{seg3_forward.1} parent=11 // pred_fallthru
        _
      // Predicated region
      $region33: #{seg3_forward.1} parent=11 // pred_check
        %p243 = pneg %p166
      $region34: #{seg3_forward.1} parent=11 // pred_check_branch
        %245 = sbr.rel (%p243) target = $region36
      $region35: #{seg3_forward.1} parent=11 // pred_region
        _
      $region36: #{seg3_forward.1} parent=11 // pred_fallthru
        _
      // Predicated region
      $region37: #{seg3_forward.1} parent=11 // pred_check
        %p246 = pneg %p187
      $region38: #{seg3_forward.1} parent=11 // pred_check_branch
        %248 = sbr.rel (%p246) target = $region40
      $region39: #{seg3_forward.1} parent=11 // pred_region
        _
      $region40: #{seg3_forward.1} parent=11 // pred_fallthru
        _
    $region12: #{seg3_forward.1} parent=5 // pred_fallthru
      _
    %p249 = scmp.lt.s32.totalorder %s14, 2
    // Predicated region
    $region41: #{seg3_forward.1} parent=5 // pred_check
      %p250 = pneg %p249
    $region42: #{seg3_forward.1} parent=5 // pred_check_branch
      %252 = sbr.rel (%p250) target = $region44
    $region43: #{seg3_forward.1} parent=5 // pred_region
      // Predicated region
      $region45: #{seg3_forward.1} parent=43 // pred_check
        %p253 = pneg %p34
      $region46: #{seg3_forward.1} parent=43 // pred_check_branch
        %255 = sbr.rel (%p253) target = $region48
      $region47: #{seg3_forward.1} parent=43 // pred_region
        %p256 = scmp.lt.s32.totalorder %s14, 1
        %s257 = scalar_select %p256, %s14, 1
        %s258 = smul.addr %s257, 2
        %s259 = smul.addr %s258, 4
        %s260 = scalar_lea.vmem %s0, %s259
      $region48: #{seg3_forward.1} parent=43 // pred_fallthru
        _
    $region44: #{seg3_forward.1} parent=5 // pred_fallthru
      _
    %p261 = scmp.le.s32.totalorder 1, %s14
    %p262 = scmp.lt.s32.totalorder %s14, 3
    %p263 = pnand %p261, %p262
    %p264 = pneg %p263
    // Predicated region
    $region49: #{seg3_forward.1} parent=5 // pred_check
      _
    $region50: #{seg3_forward.1} parent=5 // pred_check_branch
      %266 = sbr.rel (%p263) target = $region52
    $region51: #{seg3_forward.1} parent=5 // pred_region
      %s267 = ssub.s32 %s14, 1
      %p268 = scmp.lt.s32.totalorder %s19, 1
      %s269 = scalar_select %p268, %s19, 1
      %s270 = smul.addr %s269, 2
      %s271 = smul.addr %s270, 4
      %s272 = scalar_lea.vmem %s0, %s271
      %p273 = pneg %p40
      %p274 = pneg %p37
      %p275 = pneg %p61
      %p276 = pneg %p58
      %p277 = pneg %p82
      %p278 = pneg %p79
      %p279 = pneg %p103
      %p280 = pneg %p100
      %p281 = pneg %p124
      %p282 = pneg %p121
      %p283 = pneg %p145
      %p284 = pneg %p142
      %p285 = pneg %p166
      %p286 = pneg %p163
      %p287 = pneg %p187
      %p288 = pneg %p184
      %p289 = pneg %p213
      %p290 = pneg %p210
      %p291 = scmp.lt.s32.totalorder %s19, 1
      %s292 = scalar_select %p291, %s19, 1
      %s293 = smul.addr %s292, 2
      %s294 = smul.addr %s293, 4
      %s295 = scalar_lea.vmem %s8, %s294
      %p296 = scmp.lt.s32.totalorder %s19, 1
      %s297 = scalar_select %p296, %s19, 1
      %s298 = smul.addr %s297, 2
      %s299 = smul.addr %s298, 4
      %s300 = scalar_lea.vmem %s0, %s299
      %p301 = scmp.lt.s32.totalorder %s19, 1
      %s302 = scalar_select %p301, %s19, 1
      %s303 = smul.addr %s302, 2
      %s304 = smul.addr %s303, 4
      %s305 = scalar_lea.vmem %s8, %s304
      %v307 = vld [vmem:[%s300] sm:$0xff]
      %309 = vst [vmem:[#allocation1] ss:$2 sm:$0xff] %v307
      %v310 = vld.sshfl [vmem:[#allocation1] sm:$0xff pattern:$0x75316420]
      %v311 = vld.sshfl [vmem:[#allocation1 + $0x8] sm:$0xff pattern:$0x75316420]
      %314 = vrot.lane.b32.xlu0 %v310, 17
      %v315 = vpop.permute.xlu0 %314
      %316 = vrot.lane.b32.xlu0 %v311, 17
      %v317 = vpop.permute.xlu0 %316
      %v318 = vlaneseq
      %v319 = vand.u32 %v318, 127
      %vm320 = vcmp.lt.s32.totalorder %v319, 17
      %v321 = vsel %vm320, %v315, %v317
      %v322 = vsel %vm320, %v317, %v315
      %v323 = vld [vmem:[%s1] sm:$0x3]
      %v325 = vperm.slane %v323, 0
      %v326 = vperm.slane %v323, 1
      %v329 = vmul.f32 %v322, %v325
      %v330 = vmul.f32 %v321, %v326
      %331 = vst [vmem:[#allocation2] sm:$0xf] %v329
      %332 = vst [vmem:[#allocation2 + $0x8] sm:$0xf] %v330
      %333 = vst [vmem:[#allocation1] ss:$2 sm:$0xff] %v307
      %v334 = vld.sshfl [vmem:[#allocation1] sm:$0xff pattern:$0x75316420]
      %v335 = vld.sshfl [vmem:[#allocation1 + $0x8] sm:$0xff pattern:$0x75316420]
      %338 = vrot.lane.b32.xlu0 %v334, 16
      %v339 = vpop.permute.xlu0 %338
      %340 = vrot.lane.b32.xlu0 %v335, 16
      %v341 = vpop.permute.xlu0 %340
      %vm342 = vcmp.lt.s32.totalorder %v319, 16
      %v343 = vsel %vm342, %v339, %v341
      %v344 = vsel %vm342, %v341, %v339
      %s345 = scalar_lea.vmem %s1, 2
      %v346 = vld [vmem:[%s345] sm:$0x3]
      %v348 = vperm.slane %v346, 0
      %v349 = vperm.slane %v346, 1
      %v352 = vmul.f32 %v344, %v348
      %v353 = vmul.f32 %v343, %v349
      %v356 = vrot.slane %v352, 4
      %v357 = vrot.slane %v353, 4
      %360 = vst [vmem:[#allocation2] sm:$0xf0] %v356
      %361 = vst [vmem:[#allocation2 + $0x8] sm:$0xf0] %v357
      %362 = vst [vmem:[#allocation1] ss:$2 sm:$0xff] %v307
      %v363 = vld.sshfl [vmem:[#allocation1] sm:$0xff pattern:$0x75316420]
      %v364 = vld.sshfl [vmem:[#allocation1 + $0x8] sm:$0xff pattern:$0x75316420]
      %367 = vrot.lane.b32.xlu0 %v363, 15
      %v368 = vpop.permute.xlu0 %367
      %369 = vrot.lane.b32.xlu0 %v364, 15
      %v370 = vpop.permute.xlu0 %369
      %vm371 = vcmp.lt.s32.totalorder %v319, 15
      %v372 = vsel %vm371, %v368, %v370
      %v373 = vsel %vm371, %v370, %v368
      %s374 = scalar_lea.vmem %s1, 4
      %v375 = vld [vmem:[%s374] sm:$0x3]
      %v377 = vperm.slane %v375, 0
      %v378 = vperm.slane %v375, 1
      %v381 = vmul.f32 %v373, %v377
      %v382 = vmul.f32 %v372, %v378
      %383 = vst [vmem:[#allocation2 + $0x10] sm:$0xf] %v381
      %384 = vst [vmem:[#allocation2 + $0x18] sm:$0xf] %v382
      %385 = vst [vmem:[#allocation1] ss:$2 sm:$0xff] %v307
      %v386 = vld.sshfl [vmem:[#allocation1] sm:$0xff pattern:$0x75316420]
      %v387 = vld.sshfl [vmem:[#allocation1 + $0x8] sm:$0xff pattern:$0x75316420]
      %390 = vrot.lane.b32.xlu0 %v386, 1
      %v391 = vpop.permute.xlu0 %390
      %392 = vrot.lane.b32.xlu0 %v387, 1
      %v393 = vpop.permute.xlu0 %392
      %vm394 = vcmp.lt.s32.totalorder %v319, 1
      %v395 = vsel %vm394, %v391, %v393
      %v396 = vsel %vm394, %v393, %v391
      %s397 = scalar_lea.vmem %s1, 6
      %v398 = vld [vmem:[%s397] sm:$0x3]
      %v400 = vperm.slane %v398, 0
      %v401 = vperm.slane %v398, 1
      %v404 = vmul.f32 %v396, %v400
      %v405 = vmul.f32 %v395, %v401
      %v408 = vrot.slane %v404, 4
      %v409 = vrot.slane %v405, 4
      %412 = vst [vmem:[#allocation2 + $0x10] sm:$0xf0] %v408
      %413 = vst [vmem:[#allocation2 + $0x18] sm:$0xf0] %v409
      %414 = vst [vmem:[#allocation1] ss:$2 sm:$0xff] %v307
      %v415 = vld.sshfl [vmem:[#allocation1] sm:$0xff pattern:$0x75316420]
      %v416 = vld.sshfl [vmem:[#allocation1 + $0x8] sm:$0xff pattern:$0x75316420]
      %419 = vst [vmem:[#allocation2 + $0x20] sm:$0xf] %v415
      %420 = vst [vmem:[#allocation2 + $0x28] sm:$0xf] %v416
      %421 = vst [vmem:[#allocation1] ss:$2 sm:$0xff] %v307
      %v422 = vld.sshfl [vmem:[#allocation1] sm:$0xff pattern:$0x75316420]
      %v423 = vld.sshfl [vmem:[#allocation1 + $0x8] sm:$0xff pattern:$0x75316420]
      %426 = vrot.lane.b32.xlu0 %v422, 127
      %v427 = vpop.permute.xlu0 %426
      %428 = vrot.lane.b32.xlu0 %v423, 127
      %v429 = vpop.permute.xlu0 %428
      %vm430 = vcmp.lt.s32.totalorder %v319, 127
      %v431 = vsel %vm430, %v427, %v429
      %v432 = vsel %vm430, %v429, %v427
      %s433 = scalar_lea.vmem %s1, 10
      %v434 = vld [vmem:[%s433] sm:$0x3]
      %v436 = vperm.slane %v434, 0
      %v437 = vperm.slane %v434, 1
      %v440 = vmul.f32 %v431, %v436
      %v441 = vmul.f32 %v432, %v437
      %v444 = vrot.slane %v440, 4
      %v445 = vrot.slane %v441, 4
      %448 = vst [vmem:[#allocation2 + $0x20] sm:$0xf0] %v444
      %449 = vst [vmem:[#allocation2 + $0x28] sm:$0xf0] %v445
      %450 = vst [vmem:[#allocation1] ss:$2 sm:$0xff] %v307
      %v451 = vld.sshfl [vmem:[#allocation1] sm:$0xff pattern:$0x75316420]
      %v452 = vld.sshfl [vmem:[#allocation1 + $0x8] sm:$0xff pattern:$0x75316420]
      %455 = vrot.lane.b32.xlu0 %v451, 113
      %v456 = vpop.permute.xlu0 %455
      %457 = vrot.lane.b32.xlu0 %v452, 113
      %v458 = vpop.permute.xlu0 %457
      %vm459 = vcmp.lt.s32.totalorder %v319, 113
      %v460 = vsel %vm459, %v456, %v458
      %v461 = vsel %vm459, %v458, %v456
      %s462 = scalar_lea.vmem %s1, 12
      %v463 = vld [vmem:[%s462] sm:$0x3]
      %v465 = vperm.slane %v463, 0
      %v466 = vperm.slane %v463, 1
      %v469 = vmul.f32 %v460, %v465
      %v470 = vmul.f32 %v461, %v466
      %471 = vst [vmem:[#allocation2 + $0x30] sm:$0xf] %v469
      %472 = vst [vmem:[#allocation2 + $0x38] sm:$0xf] %v470
      %473 = vst [vmem:[#allocation1] ss:$2 sm:$0xff] %v307
      %v474 = vld.sshfl [vmem:[#allocation1] sm:$0xff pattern:$0x75316420]
      %v475 = vld.sshfl [vmem:[#allocation1 + $0x8] sm:$0xff pattern:$0x75316420]
      %478 = vrot.lane.b32.xlu0 %v474, 112
      %v479 = vpop.permute.xlu0 %478
      %480 = vrot.lane.b32.xlu0 %v475, 112
      %v481 = vpop.permute.xlu0 %480
      %vm482 = vcmp.lt.s32.totalorder %v319, 112
      %v483 = vsel %vm482, %v479, %v481
      %v484 = vsel %vm482, %v481, %v479
      %s485 = scalar_lea.vmem %s1, 14
      %v486 = vld [vmem:[%s485] sm:$0x3]
      %v488 = vperm.slane %v486, 0
      %v489 = vperm.slane %v486, 1
      %v492 = vmul.f32 %v483, %v488
      %v493 = vmul.f32 %v484, %v489
      %v496 = vrot.slane %v492, 4
      %v497 = vrot.slane %v493, 4
      %500 = vst [vmem:[#allocation2 + $0x30] sm:$0xf0] %v496
      %501 = vst [vmem:[#allocation2 + $0x38] sm:$0xf0] %v497
      %502 = vst [vmem:[#allocation1] ss:$2 sm:$0xff] %v307
      %v503 = vld.sshfl [vmem:[#allocation1] sm:$0xff pattern:$0x75316420]
      %v504 = vld.sshfl [vmem:[#allocation1 + $0x8] sm:$0xff pattern:$0x75316420]
      %507 = vrot.lane.b32.xlu0 %v503, 111
      %v508 = vpop.permute.xlu0 %507
      %509 = vrot.lane.b32.xlu0 %v504, 111
      %v510 = vpop.permute.xlu0 %509
      %vm511 = vcmp.lt.s32.totalorder %v319, 111
      %v512 = vsel %vm511, %v508, %v510
      %v513 = vsel %vm511, %v510, %v508
      %s514 = scalar_lea.vmem %s1, 16
      %v515 = vld [vmem:[%s514] sm:$0x3]
      %v517 = vperm.slane %v515, 0
      %v518 = vperm.slane %v515, 1
      %v521 = vmul.f32 %v512, %v517
      %v522 = vmul.f32 %v513, %v518
      %523 = vst [vmem:[#allocation2 + $0x40] sm:$0xf] %v521
      %524 = vst [vmem:[#allocation2 + $0x48] sm:$0xf] %v522
      %v525 = vld [vmem:[#allocation2] sm:$0xff]
      %v526 = vld [vmem:[#allocation2 + $0x8] sm:$0xff]
      %v527 = vld [vmem:[#allocation2 + $0x10] sm:$0xff]
      %v528 = vld [vmem:[#allocation2 + $0x18] sm:$0xff]
      %v529 = vld [vmem:[#allocation2 + $0x20] sm:$0xff]
      %v530 = vld [vmem:[#allocation2 + $0x28] sm:$0xff]
      %v531 = vld [vmem:[#allocation2 + $0x30] sm:$0xff]
      %v532 = vld [vmem:[#allocation2 + $0x38] sm:$0xff]
      %v533 = vld [vmem:[#allocation2 + $0x40] sm:$0xf]
      %v534 = vld [vmem:[#allocation2 + $0x48] sm:$0xf]
      %v535 = vpack.c.bf16 %v527, %v525
      %v536 = vpack.c.bf16 %v528, %v526
      %v537 = vpack.c.bf16 %v531, %v529
      %v538 = vpack.c.bf16 %v532, %v530
      %v539 = vpack.c.bf16 %v533, %v533
      %v540 = vpack.c.bf16 %v534, %v534
      %v541 = vld [vmem:[%s2] sm:$0xf]
      %v542 = vld [vmem:[%s2 + $0x4] sm:$0xf]
      %v543 = vld [vmem:[%s3] sm:$0xff]
      %v544 = vld [vmem:[%s3 + $0x8] sm:$0xff]
      %546 = vset.pattern.permute.xlu0 0
      %547 = vperm.xlu0 %546, %v543
      %v548 = vpop.permute.xlu0 %547
      %551 = vset.pattern.permute.xlu0 0
      %552 = vperm.xlu0 %551, %v544
      %v553 = vpop.permute.xlu0 %552
      %v557 = vunpack.c.l.b16 %v541
      %v558 = vunpack.c.l.b16 %v542
      %v559 = vpack.c.b16 %v558, %v557
      %vm560 = vcmask 293888
      %v562 = vsel %vm560, %v559, 0
      %vm564 = vcmask 1041408
      %v566 = vsel %vm564, %v539, 0
      %v569 = vsel %vm564, %v540, 0
      %571 = vmatpush.bf16.msra.mxu0 0
      %572 = vmatpush.bf16.msra.mxu0 0
      %573 = vmatpush.bf16.msra.mxu0 0
      %574 = vmatpush.bf16.msra.mxu0 0
      %575 = vmatpush.bf16.msra.mxu0 0
      %576 = vmatpush.bf16.msra.mxu0 %v566
      %577 = vmatpush.bf16.msra.mxu0 %v537
      %578 = vmatpush.bf16.msra.mxu0 %v535
      %579 = vmatmul.bf16.gmra.mxu0 %v562
      %v580 = vpop.f32.mrf.mxu0
      %v581 = vadd.f32 %v548, %v580
      %v582 = vpop.f32.mrf.mxu0
      %v583 = vadd.f32 %v553, %v582
      %584 = vdwg.mxu0
      %585 = vmatpush.bf16.msra.mxu0 0
      %586 = vmatpush.bf16.msra.mxu0 0
      %587 = vmatpush.bf16.msra.mxu0 0
      %588 = vmatpush.bf16.msra.mxu0 0
      %589 = vmatpush.bf16.msra.mxu0 0
      %590 = vmatpush.bf16.msra.mxu0 %v569
      %591 = vmatpush.bf16.msra.mxu0 %v538
      %592 = vmatpush.bf16.msra.mxu0 %v536
      %593 = vmatmul.bf16.gmra.mxu0 %v562
      %v594 = vpop.f32.mrf.mxu0
      %v595 = vadd.f32 %v548, %v594
      %v596 = vpop.f32.mrf.mxu0
      %v597 = vadd.f32 %v553, %v596
      %598 = vdwg.mxu0
      %v599 = vmax.f32 %v581, 0.0
      %v600 = vmax.f32 %v595, 0.0
      %v601 = vmax.f32 %v583, 0.0
      %v602 = vmax.f32 %v597, 0.0
      %603 = vrot.lane.b32.xlu0 %v599, 17
      %v604 = vpop.permute.xlu0 %603
      %605 = vrot.lane.b32.xlu0 %v601, 17
      %v606 = vpop.permute.xlu0 %605
      %607 = vrot.lane.b32.xlu0 %v600, 17
      %v608 = vpop.permute.xlu0 %607
      %609 = vrot.lane.b32.xlu0 %v602, 17
      %v610 = vpop.permute.xlu0 %609
      %v611 = vsel %vm320, %v604, %v608
      %v612 = vsel %vm320, %v606, %v610
      %v613 = vsel %vm320, %v608, %v604
      %v614 = vsel %vm320, %v610, %v606
      %v615 = vld [vmem:[%s1] sm:$0x3]
      %v617 = vperm.slane %v615, 0
      %v618 = vperm.slane %v615, 1
      %v621 = vmul.f32 %v613, %v617
      %v622 = vmul.f32 %v611, %v618
      %v623 = vmul.f32 %v614, %v617
      %v624 = vmul.f32 %v612, %v618
      %625 = vst [vmem:[#allocation3] sm:$0xff] %v621
      %626 = vst [vmem:[#allocation3 + $0x8] sm:$0xff] %v622
      %627 = vst [vmem:[#allocation3 + $0x10] sm:$0xff] %v623
      %628 = vst [vmem:[#allocation3 + $0x18] sm:$0xff] %v624
      %629 = vrot.lane.b32.xlu0 %v599, 16
      %v630 = vpop.permute.xlu0 %629
      %631 = vrot.lane.b32.xlu0 %v601, 16
      %v632 = vpop.permute.xlu0 %631
      %633 = vrot.lane.b32.xlu0 %v600, 16
      %v634 = vpop.permute.xlu0 %633
      %635 = vrot.lane.b32.xlu0 %v602, 16
      %v636 = vpop.permute.xlu0 %635
      %v637 = vsel %vm342, %v630, %v634
      %v638 = vsel %vm342, %v632, %v636
      %v639 = vsel %vm342, %v634, %v630
      %v640 = vsel %vm342, %v636, %v632
      %v641 = vld [vmem:[%s345] sm:$0x3]
      %v643 = vperm.slane %v641, 0
      %v644 = vperm.slane %v641, 1
      %v647 = vmul.f32 %v639, %v643
      %v648 = vmul.f32 %v637, %v644
      %v649 = vmul.f32 %v640, %v643
      %v650 = vmul.f32 %v638, %v644
      %651 = vst [vmem:[#allocation3 + $0x20] sm:$0xff] %v647
      %652 = vst [vmem:[#allocation3 + $0x28] sm:$0xff] %v648
      %653 = vst [vmem:[#allocation3 + $0x30] sm:$0xff] %v649
      %654 = vst [vmem:[#allocation3 + $0x38] sm:$0xff] %v650
      %655 = vrot.lane.b32.xlu0 %v599, 15
      %v656 = vpop.permute.xlu0 %655
      %657 = vrot.lane.b32.xlu0 %v601, 15
      %v658 = vpop.permute.xlu0 %657
      %659 = vrot.lane.b32.xlu0 %v600, 15
      %v660 = vpop.permute.xlu0 %659
      %661 = vrot.lane.b32.xlu0 %v602, 15
      %v662 = vpop.permute.xlu0 %661
      %v663 = vsel %vm371, %v656, %v660
      %v664 = vsel %vm371, %v658, %v662
      %v665 = vsel %vm371, %v660, %v656
      %v666 = vsel %vm371, %v662, %v658
      %v667 = vld [vmem:[%s374] sm:$0x3]
      %v669 = vperm.slane %v667, 0
      %v670 = vperm.slane %v667, 1
      %v673 = vmul.f32 %v665, %v669
      %v674 = vmul.f32 %v663, %v670
      %v675 = vmul.f32 %v666, %v669
      %v676 = vmul.f32 %v664, %v670
      %677 = vst [vmem:[#allocation3 + $0x40] sm:$0xff] %v673
      %678 = vst [vmem:[#allocation3 + $0x48] sm:$0xff] %v674
      %679 = vst [vmem:[#allocation3 + $0x50] sm:$0xff] %v675
      %680 = vst [vmem:[#allocation3 + $0x58] sm:$0xff] %v676
      %681 = vrot.lane.b32.xlu0 %v599, 1
      %v682 = vpop.permute.xlu0 %681
      %683 = vrot.lane.b32.xlu0 %v601, 1
      %v684 = vpop.permute.xlu0 %683
      %685 = vrot.lane.b32.xlu0 %v600, 1
      %v686 = vpop.permute.xlu0 %685
      %687 = vrot.lane.b32.xlu0 %v602, 1
      %v688 = vpop.permute.xlu0 %687
      %v689 = vsel %vm394, %v682, %v686
      %v690 = vsel %vm394, %v684, %v688
      %v691 = vsel %vm394, %v686, %v682
      %v692 = vsel %vm394, %v688, %v684
      %v693 = vld [vmem:[%s397] sm:$0x3]
      %v695 = vperm.slane %v693, 0
      %v696 = vperm.slane %v693, 1
      %v699 = vmul.f32 %v691, %v695
      %v700 = vmul.f32 %v689, %v696
      %v701 = vmul.f32 %v692, %v695
      %v702 = vmul.f32 %v690, %v696
      %703 = vst [vmem:[#allocation3 + $0x60] sm:$0xff] %v699
      %704 = vst [vmem:[#allocation3 + $0x68] sm:$0xff] %v700
      %705 = vst [vmem:[#allocation3 + $0x70] sm:$0xff] %v701
      %706 = vst [vmem:[#allocation3 + $0x78] sm:$0xff] %v702
      %707 = vst [vmem:[#allocation3 + $0x80] sm:$0xff] %v599
      %708 = vst [vmem:[#allocation3 + $0x88] sm:$0xff] %v600
      %709 = vst [vmem:[#allocation3 + $0x90] sm:$0xff] %v601
      %710 = vst [vmem:[#allocation3 + $0x98] sm:$0xff] %v602
      %711 = vrot.lane.b32.xlu0 %v599, 127
      %v712 = vpop.permute.xlu0 %711
      %713 = vrot.lane.b32.xlu0 %v601, 127
      %v714 = vpop.permute.xlu0 %713
      %715 = vrot.lane.b32.xlu0 %v600, 127
      %v716 = vpop.permute.xlu0 %715
      %717 = vrot.lane.b32.xlu0 %v602, 127
      %v718 = vpop.permute.xlu0 %717
      %v719 = vsel %vm430, %v712, %v716
      %v720 = vsel %vm430, %v714, %v718
      %v721 = vsel %vm430, %v716, %v712
      %v722 = vsel %vm430, %v718, %v714
      %v723 = vld [vmem:[%s433] sm:$0x3]
      %v725 = vperm.slane %v723, 0
      %v726 = vperm.slane %v723, 1
      %v729 = vmul.f32 %v719, %v725
      %v730 = vmul.f32 %v721, %v726
      %v731 = vmul.f32 %v720, %v725
      %v732 = vmul.f32 %v722, %v726
      %733 = vst [vmem:[#allocation3 + $0xa0] sm:$0xff] %v729
      %734 = vst [vmem:[#allocation3 + $0xa8] sm:$0xff] %v730
      %735 = vst [vmem:[#allocation3 + $0xb0] sm:$0xff] %v731
      %736 = vst [vmem:[#allocation3 + $0xb8] sm:$0xff] %v732
      %737 = vrot.lane.b32.xlu0 %v599, 113
      %v738 = vpop.permute.xlu0 %737
      %739 = vrot.lane.b32.xlu0 %v601, 113
      %v740 = vpop.permute.xlu0 %739
      %741 = vrot.lane.b32.xlu0 %v600, 113
      %v742 = vpop.permute.xlu0 %741
      %743 = vrot.lane.b32.xlu0 %v602, 113
      %v744 = vpop.permute.xlu0 %743
      %v745 = vsel %vm459, %v738, %v742
      %v746 = vsel %vm459, %v740, %v744
      %v747 = vsel %vm459, %v742, %v738
      %v748 = vsel %vm459, %v744, %v740
      %v749 = vld [vmem:[%s462] sm:$0x3]
      %v751 = vperm.slane %v749, 0
      %v752 = vperm.slane %v749, 1
      %v755 = vmul.f32 %v745, %v751
      %v756 = vmul.f32 %v747, %v752
      %v757 = vmul.f32 %v746, %v751
      %v758 = vmul.f32 %v748, %v752
      %759 = vst [vmem:[#allocation3 + $0xc0] sm:$0xff] %v755
      %760 = vst [vmem:[#allocation3 + $0xc8] sm:$0xff] %v756
      %761 = vst [vmem:[#allocation3 + $0xd0] sm:$0xff] %v757
      %762 = vst [vmem:[#allocation3 + $0xd8] sm:$0xff] %v758
      %763 = vrot.lane.b32.xlu0 %v599, 112
      %v764 = vpop.permute.xlu0 %763
      %765 = vrot.lane.b32.xlu0 %v601, 112
      %v766 = vpop.permute.xlu0 %765
      %767 = vrot.lane.b32.xlu0 %v600, 112
      %v768 = vpop.permute.xlu0 %767
      %769 = vrot.lane.b32.xlu0 %v602, 112
      %v770 = vpop.permute.xlu0 %769
      %v771 = vsel %vm482, %v764, %v768
      %v772 = vsel %vm482, %v766, %v770
      %v773 = vsel %vm482, %v768, %v764
      %v774 = vsel %vm482, %v770, %v766
      %v775 = vld [vmem:[%s485] sm:$0x3]
      %v777 = vperm.slane %v775, 0
      %v778 = vperm.slane %v775, 1
      %v781 = vmul.f32 %v771, %v777
      %v782 = vmul.f32 %v773, %v778
      %v783 = vmul.f32 %v772, %v777
      %v784 = vmul.f32 %v774, %v778
      %785 = vst [vmem:[#allocation3 + $0xe0] sm:$0xff] %v781
      %786 = vst [vmem:[#allocation3 + $0xe8] sm:$0xff] %v782
      %787 = vst [vmem:[#allocation3 + $0xf0] sm:$0xff] %v783
      %788 = vst [vmem:[#allocation3 + $0xf8] sm:$0xff] %v784
      %789 = vrot.lane.b32.xlu0 %v599, 111
      %v790 = vpop.permute.xlu0 %789
      %791 = vrot.lane.b32.xlu0 %v601, 111
      %v792 = vpop.permute.xlu0 %791
      %793 = vrot.lane.b32.xlu0 %v600, 111
      %v794 = vpop.permute.xlu0 %793
      %795 = vrot.lane.b32.xlu0 %v602, 111
      %v796 = vpop.permute.xlu0 %795
      %v797 = vsel %vm511, %v790, %v794
      %v798 = vsel %vm511, %v792, %v796
      %v799 = vsel %vm511, %v794, %v790
      %v800 = vsel %vm511, %v796, %v792
      %v801 = vld [vmem:[%s514] sm:$0x3]
      %v803 = vperm.slane %v801, 0
      %v804 = vperm.slane %v801, 1
      %v807 = vmul.f32 %v797, %v803
      %v808 = vmul.f32 %v799, %v804
      %v809 = vmul.f32 %v798, %v803
      %v810 = vmul.f32 %v800, %v804
      %811 = vst [vmem:[#allocation3 + $0x100] sm:$0xff] %v807
      %812 = vst [vmem:[#allocation3 + $0x108] sm:$0xff] %v808
      %813 = vst [vmem:[#allocation3 + $0x110] sm:$0xff] %v809
      %814 = vst [vmem:[#allocation3 + $0x118] sm:$0xff] %v810
      %v815 = vld [vmem:[#allocation3] sm:$0xff]
      %v816 = vld [vmem:[#allocation3 + $0x8] sm:$0xff]
      %v817 = vld [vmem:[#allocation3 + $0x10] sm:$0xff]
      %v818 = vld [vmem:[#allocation3 + $0x18] sm:$0xff]
      %v819 = vld [vmem:[#allocation3 + $0x20] sm:$0xff]
      %v820 = vld [vmem:[#allocation3 + $0x28] sm:$0xff]
      %v821 = vld [vmem:[#allocation3 + $0x30] sm:$0xff]
      %v822 = vld [vmem:[#allocation3 + $0x38] sm:$0xff]
      %v823 = vld [vmem:[#allocation3 + $0x40] sm:$0xff]
      %v824 = vld [vmem:[#allocation3 + $0x48] sm:$0xff]
      %v825 = vld [vmem:[#allocation3 + $0x50] sm:$0xff]
      %v826 = vld [vmem:[#allocation3 + $0x58] sm:$0xff]
      %v827 = vld [vmem:[#allocation3 + $0x60] sm:$0xff]
      %v828 = vld [vmem:[#allocation3 + $0x68] sm:$0xff]
      %v829 = vld [vmem:[#allocation3 + $0x70] sm:$0xff]
      %v830 = vld [vmem:[#allocation3 + $0x78] sm:$0xff]
      %v831 = vld [vmem:[#allocation3 + $0x80] sm:$0xff]
      %v832 = vld [vmem:[#allocation3 + $0x88] sm:$0xff]
      %v833 = vld [vmem:[#allocation3 + $0x90] sm:$0xff]
      %v834 = vld [vmem:[#allocation3 + $0x98] sm:$0xff]
      %v835 = vld [vmem:[#allocation3 + $0xa0] sm:$0xff]
      %v836 = vld [vmem:[#allocation3 + $0xa8] sm:$0xff]
      %v837 = vld [vmem:[#allocation3 + $0xb0] sm:$0xff]
      %v838 = vld [vmem:[#allocation3 + $0xb8] sm:$0xff]
      %v839 = vld [vmem:[#allocation3 + $0xc0] sm:$0xff]
      %v840 = vld [vmem:[#allocation3 + $0xc8] sm:$0xff]
      %v841 = vld [vmem:[#allocation3 + $0xd0] sm:$0xff]
      %v842 = vld [vmem:[#allocation3 + $0xd8] sm:$0xff]
      %v843 = vld [vmem:[#allocation3 + $0xe0] sm:$0xff]
      %v844 = vld [vmem:[#allocation3 + $0xe8] sm:$0xff]
      %v845 = vld [vmem:[#allocation3 + $0xf0] sm:$0xff]
      %v846 = vld [vmem:[#allocation3 + $0xf8] sm:$0xff]
      %v847 = vld [vmem:[#allocation3 + $0x100] sm:$0xff]
      %v848 = vld [vmem:[#allocation3 + $0x108] sm:$0xff]
      %v849 = vld [vmem:[#allocation3 + $0x110] sm:$0xff]
      %v850 = vld [vmem:[#allocation3 + $0x118] sm:$0xff]
      %v851 = vpack.c.bf16 %v817, %v815
      %v852 = vpack.c.bf16 %v818, %v816
      %v853 = vpack.c.bf16 %v821, %v819
      %v854 = vpack.c.bf16 %v822, %v820
      %v855 = vpack.c.bf16 %v825, %v823
      %v856 = vpack.c.bf16 %v826, %v824
      %v857 = vpack.c.bf16 %v829, %v827
      %v858 = vpack.c.bf16 %v830, %v828
      %v859 = vpack.c.bf16 %v833, %v831
      %v860 = vpack.c.bf16 %v834, %v832
      %v861 = vpack.c.bf16 %v837, %v835
      %v862 = vpack.c.bf16 %v838, %v836
      %v863 = vpack.c.bf16 %v841, %v839
      %v864 = vpack.c.bf16 %v842, %v840
      %v865 = vpack.c.bf16 %v845, %v843
      %v866 = vpack.c.bf16 %v846, %v844
      %v867 = vpack.c.bf16 %v849, %v847
      %v868 = vpack.c.bf16 %v850, %v848
      %v869 = vld [vmem:[%s4] sm:$0xff]
      %v870 = vld [vmem:[%s4 + $0x8] sm:$0xff]
      %v871 = vld [vmem:[%s4 + $0x10] sm:$0xff]
      %v872 = vld [vmem:[%s4 + $0x18] sm:$0xff]
      %v873 = vld [vmem:[%s5] sm:$0xff]
      %v874 = vld [vmem:[%s5 + $0x8] sm:$0xff]
      %v875 = vld [vmem:[%s5 + $0x10] sm:$0xff]
      %v876 = vld [vmem:[%s5 + $0x18] sm:$0xff]
      %878 = vset.pattern.permute.xlu0 0
      %879 = vperm.xlu0 %878, %v873
      %v880 = vpop.permute.xlu0 %879
      %883 = vset.pattern.permute.xlu0 0
      %884 = vperm.xlu0 %883, %v874
      %v885 = vpop.permute.xlu0 %884
      %888 = vset.pattern.permute.xlu0 0
      %889 = vperm.xlu0 %888, %v875
      %v890 = vpop.permute.xlu0 %889
      %893 = vset.pattern.permute.xlu0 0
      %894 = vperm.xlu0 %893, %v876
      %v895 = vpop.permute.xlu0 %894
      %v901 = vunpack.c.l.b16 %v869
      %v902 = vunpack.c.h.b16 %v869
      %v903 = vunpack.c.l.b16 %v870
      %v904 = vunpack.c.h.b16 %v870
      %v905 = vunpack.c.l.b16 %v871
      %v906 = vunpack.c.h.b16 %v871
      %v907 = vunpack.c.l.b16 %v872
      %v908 = vunpack.c.h.b16 %v872
      %v909 = vpack.c.b16 %v903, %v901
      %v910 = vpack.c.b16 %v904, %v902
      %v911 = vpack.c.b16 %v907, %v905
      %v912 = vpack.c.b16 %v908, %v906
      %vm915 = vcmask 130048
      %v917 = vsel %vm915, %v910, 0
      %v920 = vsel %vm915, %v912, 0
      %922 = vmatpush.bf16.msra.mxu0 %v865
      %923 = vmatpush.bf16.msra.mxu0 %v863
      %924 = vmatpush.bf16.msra.mxu0 %v861
      %925 = vmatpush.bf16.msra.mxu0 %v859
      %926 = vmatpush.bf16.msra.mxu0 %v857
      %927 = vmatpush.bf16.msra.mxu0 %v855
      %928 = vmatpush.bf16.msra.mxu0 %v853
      %929 = vmatpush.bf16.msra.mxu0 %v851
      %930 = vmatmul.bf16.gmra.mxu0 %v909
      %v931 = vpop.f32.mrf.mxu0
      %v932 = vadd.f32 %v880, %v931
      %v933 = vpop.f32.mrf.mxu0
      %v934 = vadd.f32 %v885, %v933
      %935 = vmatmul.bf16.gmra.mxu0 %v911
      %v936 = vpop.f32.mrf.mxu0
      %v937 = vadd.f32 %v890, %v936
      %v938 = vpop.f32.mrf.mxu0
      %v939 = vadd.f32 %v895, %v938
      %940 = vdwg.mxu0
      %941 = vmatpush.bf16.msra.mxu0 0
      %942 = vmatpush.bf16.msra.mxu0 0
      %943 = vmatpush.bf16.msra.mxu0 0
      %944 = vmatpush.bf16.msra.mxu0 0
      %945 = vmatpush.bf16.msra.mxu0 0
      %946 = vmatpush.bf16.msra.mxu0 0
      %947 = vmatpush.bf16.msra.mxu0 0
      %948 = vmatpush.bf16.msra.mxu0 %v867
      %949 = vmatmul.bf16.gmra.mxu0 %v917
      %v950 = vpop.f32.mrf.mxu0
      %v951 = vadd.f32 %v932, %v950
      %v952 = vpop.f32.mrf.mxu0
      %v953 = vadd.f32 %v934, %v952
      %954 = vmatmul.bf16.gmra.mxu0 %v920
      %v955 = vpop.f32.mrf.mxu0
      %v956 = vadd.f32 %v937, %v955
      %v957 = vpop.f32.mrf.mxu0
      %v958 = vadd.f32 %v939, %v957
      %959 = vdwg.mxu0
      %960 = vmatpush.bf16.msra.mxu0 %v866
      %961 = vmatpush.bf16.msra.mxu0 %v864
      %962 = vmatpush.bf16.msra.mxu0 %v862
      %963 = vmatpush.bf16.msra.mxu0 %v860
      %964 = vmatpush.bf16.msra.mxu0 %v858
      %965 = vmatpush.bf16.msra.mxu0 %v856
      %966 = vmatpush.bf16.msra.mxu0 %v854
      %967 = vmatpush.bf16.msra.mxu0 %v852
      %968 = vmatmul.bf16.gmra.mxu0 %v909
      %v969 = vpop.f32.mrf.mxu0
      %v970 = vadd.f32 %v880, %v969
      %v971 = vpop.f32.mrf.mxu0
      %v972 = vadd.f32 %v885, %v971
      %973 = vmatmul.bf16.gmra.mxu0 %v911
      %v974 = vpop.f32.mrf.mxu0
      %v975 = vadd.f32 %v890, %v974
      %v976 = vpop.f32.mrf.mxu0
      %v977 = vadd.f32 %v895, %v976
      %978 = vdwg.mxu0
      %979 = vmatpush.bf16.msra.mxu0 0
      %980 = vmatpush.bf16.msra.mxu0 0
      %981 = vmatpush.bf16.msra.mxu0 0
      %982 = vmatpush.bf16.msra.mxu0 0
      %983 = vmatpush.bf16.msra.mxu0 0
      %984 = vmatpush.bf16.msra.mxu0 0
      %985 = vmatpush.bf16.msra.mxu0 0
      %986 = vmatpush.bf16.msra.mxu0 %v868
      %987 = vmatmul.bf16.gmra.mxu0 %v917
      %v988 = vpop.f32.mrf.mxu0
      %v989 = vadd.f32 %v970, %v988
      %v990 = vpop.f32.mrf.mxu0
      %v991 = vadd.f32 %v972, %v990
      %992 = vmatmul.bf16.gmra.mxu0 %v920
      %v993 = vpop.f32.mrf.mxu0
      %v994 = vadd.f32 %v975, %v993
      %v995 = vpop.f32.mrf.mxu0
      %v996 = vadd.f32 %v977, %v995
      %997 = vdwg.mxu0
      %v998 = vmax.f32 %v951, 0.0
      %v999 = vmax.f32 %v989, 0.0
      %v1000 = vmax.f32 %v953, 0.0
      %v1001 = vmax.f32 %v991, 0.0
      %v1002 = vmax.f32 %v956, 0.0
      %v1003 = vmax.f32 %v994, 0.0
      %v1004 = vmax.f32 %v958, 0.0
      %v1005 = vmax.f32 %v996, 0.0
      %v1006 = vld [vmem:[%s6] sm:$0x3]
      %v1007 = vpack.c.bf16 %v1000, %v998
      %v1008 = vpack.c.bf16 %v1001, %v999
      %v1009 = vpack.c.bf16 %v1004, %v1002
      %v1010 = vpack.c.bf16 %v1005, %v1003
      %v1011 = vld [vmem:[%s7] sm:$0x7]
      %1013 = vset.pattern.permute.xlu0 0
      %1014 = vperm.xlu0 %1013, %v1011
      %v1015 = vpop.permute.xlu0 %1014
      %vm1017 = vcmask 261120
      %v1019 = vsel %vm1017, %v1006, 0
      %1021 = vmatpush.bf16.msra.mxu0 0
      %1022 = vmatpush.bf16.msra.mxu0 0
      %1023 = vmatpush.bf16.msra.mxu0 0
      %1024 = vmatpush.bf16.msra.mxu0 0
      %1025 = vmatpush.bf16.msra.mxu0 0
      %1026 = vmatpush.bf16.msra.mxu0 0
      %1027 = vmatpush.bf16.msra.mxu0 %v1009
      %1028 = vmatpush.bf16.msra.mxu0 %v1007
      %1029 = vmatmul.bf16.gmra.mxu0 %v1019
      %v1030 = vpop.f32.mrf.mxu0
      %v1031 = vadd.f32 %v1015, %v1030
      %v1032 = vpop.f32.mrf.mxu0
      %1033 = vdwg.mxu0
      %1034 = vmatpush.bf16.msra.mxu0 0
      %1035 = vmatpush.bf16.msra.mxu0 0
      %1036 = vmatpush.bf16.msra.mxu0 0
      %1037 = vmatpush.bf16.msra.mxu0 0
      %1038 = vmatpush.bf16.msra.mxu0 0
      %1039 = vmatpush.bf16.msra.mxu0 0
      %1040 = vmatpush.bf16.msra.mxu0 %v1010
      %1041 = vmatpush.bf16.msra.mxu0 %v1008
      %1042 = vmatmul.bf16.gmra.mxu0 %v1019
      %v1043 = vpop.f32.mrf.mxu0
      %v1044 = vadd.f32 %v1015, %v1043
      %v1045 = vpop.f32.mrf.mxu0
      %1046 = vdwg.mxu0
      %v1049 = vrot.slane %v1044, 4
      %vm1050 = vcmask 1043456
      %v1051 = vsel %vm1050, %v1031, %v1049
      %1053 = vst [vmem:[%s305] sm:$0x77] %v1051
      %p1054 = scmp.lt.s32.totalorder %s19, 1
      %s1055 = scalar_select %p1054, %s19, 1
      %s1056 = smul.addr %s1055, 2
      %s1057 = smul.addr %s1056, 4
      %s1058 = scalar_lea.vmem %s8, %s1057
      // Predicated region
      $region53: #{seg3_forward.1} parent=51 // pred_check
        %p1059 = pneg %p210
      $region54: #{seg3_forward.1} parent=51 // pred_check_branch
        %1061 = sbr.rel (%p1059) target = $region56
      $region55: #{seg3_forward.1} parent=51 // pred_region
        _
      $region56: #{seg3_forward.1} parent=51 // pred_fallthru
        _
    $region52: #{seg3_forward.1} parent=5 // pred_fallthru
      _
    %p1062 = scmp.le.s32.totalorder 2, %s14
    // Predicated region
    $region57: #{seg3_forward.1} parent=5 // pred_check
      %p1063 = pneg %p1062
    $region58: #{seg3_forward.1} parent=5 // pred_check_branch
      %1065 = sbr.rel (%p1063) target = $region60
    $region59: #{seg3_forward.1} parent=5 // pred_region
      %s1066 = ssub.s32 %s14, 2
      // Predicated region
      $region61: #{seg3_forward.1} parent=59 // pred_check
        %p1067 = pneg %p216
      $region62: #{seg3_forward.1} parent=59 // pred_check_branch
        %1069 = sbr.rel (%p1067) target = $region64
      $region63: #{seg3_forward.1} parent=59 // pred_region
        %p1070 = scmp.lt.s32.totalorder %s20, 1
        %s1071 = scalar_select %p1070, %s20, 1
        %s1072 = smul.addr %s1071, 2
        %s1073 = smul.addr %s1072, 4
        %s1074 = scalar_lea.vmem %s8, %s1073
      $region64: #{seg3_forward.1} parent=59 // pred_fallthru
        _
    $region60: #{seg3_forward.1} parent=5 // pred_fallthru
      _
  $region6: #{seg3_forward.1} parent=0 // loop_footer
    %s18 = sadd.s32 1, %s14
  $region7: #{seg3_forward.1} parent=0 // loop_footer_branch
    %13 = sbr.rel target = $region3
  $region8: #{seg3_forward.1} parent=0 // loop_exit
    _

</llo_original>
